<compile_context>
chip_gen: v7x
topology: tpu7x:2x2x1
jax: 0.10.0
libtpu: 0.0.40
codegen_flags: <defaults>
</compile_context>

<pallas_src>
import jax
import jax.numpy as jnp
from jax.experimental import pallas as pl
from jax.experimental.pallas import tpu as pltpu


# ----------------------------------------------------------------------------
# Pallas kernel: one batch tile (Bt rows) per grid step.
# Two matmuls total, no in-kernel relayout.
# ----------------------------------------------------------------------------
def _res_cheb_gc_diff_kernel(x_ref, tp_ref, w1_ref, b1_ref, w2_ref, b2_ref,
                             o_ref):
    cd = w1_ref.dtype                                   # MXU operand dtype

    x = x_ref[...].astype(jnp.float32)                  # (Bt, N*Cin)

    # ---- gconv1: fused Chebyshev conv -> bias -> ReLU -----------------------
    h = jnp.dot(x.astype(cd), w1_ref[...],
                preferred_element_type=jnp.float32)     # (Bt, N*hid)
    h = jnp.maximum(h + b1_ref[...], 0.0)

    # ---- time-embedding injection (pre-projected & pre-tiled in wrapper) ----
    h = h + tp_ref[...].astype(jnp.float32)             # lane-aligned VPU add

    # ---- gconv2: fused Chebyshev conv -> bias -> ReLU -----------------------
    o = jnp.dot(h.astype(cd), w2_ref[...],
                preferred_element_type=jnp.float32)     # (Bt, N*Cout)
    o = jnp.maximum(o + b2_ref[...], 0.0)

    # ---- residual + lane-dense store (N*Cout = multiple of 128) -------------
    o_ref[...] = (x + o).astype(o_ref.dtype)


# ----------------------------------------------------------------------------
# Glue (plain JAX): normalized graph Laplacian and Chebyshev basis T0..T_{K-1}.
# ----------------------------------------------------------------------------
def cheb_basis(adj, K=3):
    n = adj.shape[0]
    d = jnp.sum(adj, axis=-1)
    # guard against zero-degree nodes (no self-loop) -> no inf/NaN
    d_inv_sqrt = jnp.where(d > 0, jax.lax.rsqrt(jnp.maximum(d, 1e-12)), 0.0)
    lap = jnp.eye(n, dtype=adj.dtype) - (d_inv_sqrt[:, None] * adj * d_inv_sqrt[None, :])
    ts = [jnp.eye(n, dtype=adj.dtype), lap]
    for _ in range(2, K):
        ts.append(2.0 * (lap @ ts[-1]) - ts[-2])
    return jnp.stack(ts[:K])                             # (K, N, N)


def _plan_batch_tiling(B, max_batch_per_tile=64):
    """Returns (Bt, num_tiles, padded_B).

    v5e/v6e (1 TC): one fat grid step when the batch fits the cap.
    v7x (2 TCs): split only when each tile keeps >= 8 sublane rows (B >= 16),
    and keep an even number of grid steps so both cores get equal work.
    Awkward batch sizes are padded (never fall back to Bt=1)."""
    try:
        kind = jax.devices()[0].device_kind.lower().replace(" ", "")
    except Exception:
        kind = ""
    two_cores = ("v7" in kind) or ("tpu7" in kind)

    if B <= max_batch_per_tile and not (two_cores and B >= 16):
        return B, 1, B                                   # single fat step, no padding

    num_tiles = -(-B // max_batch_per_tile)
    if two_cores:
        num_tiles = max(2, num_tiles + (num_tiles % 2))  # even step count
    bt = -(-B // num_tiles)
    bt = -(-bt // 8) * 8                                 # sublane-align the tile
    return bt, num_tiles, num_tiles * bt


def res_cheb_gc_diff(x, temb, adj, params, *, compute_dtype=jnp.bfloat16,
                     max_batch_per_tile=64):
    """x: (B,N,Cin), temb: (B,E), adj: (N,N). Returns (B,N,Cout)."""
    w1, b1, wt, bt_lin, w2, b2 = params
    B, N, Cin = x.shape
    K, _, hid = w1.shape
    Cout = w2.shape[-1]
    assert Cin == Cout, "residual connection requires input_dim == output_dim"

    # ---- fold the Chebyshev basis into the weights (wrapper-side, one-off) ---
    #   Wf[(m,c),(n,d)] = sum_k L[k,n,m] * W[k,c,d]
    mul_L = cheb_basis(adj, K).astype(jnp.float32)                      # (K, N, N)
    wf1 = jnp.einsum('knm,kcd->mcnd', mul_L, w1.astype(jnp.float32))
    wf1 = wf1.reshape(N * Cin, N * hid).astype(compute_dtype)           # (N*Cin, N*hid)
    wf2 = jnp.einsum('knm,kcd->mcnd', mul_L, w2.astype(jnp.float32))
    wf2 = wf2.reshape(N * hid, N * Cout).astype(compute_dtype)          # (N*hid, N*Cout)
    b1_full = jnp.tile(jnp.asarray(b1, jnp.float32), N).reshape(1, N * hid)
    b2_full = jnp.tile(jnp.asarray(b2, jnp.float32), N).reshape(1, N * Cout)

    # ---- hoisted time-embedding projection, pre-tiled over nodes ------------
    t = temb.astype(jnp.float32)
    tp = (t * jax.nn.sigmoid(t)) @ wt.astype(jnp.float32) + bt_lin.astype(jnp.float32)
    tp_full = jnp.tile(tp, (1, N))                                      # (B, N*hid)

    # ---- lane-dense input slab ----------------------------------------------
    x_flat = x.reshape(B, N * Cin)

    Bt, num_tiles, b_pad = _plan_batch_tiling(B, max_batch_per_tile)
    if b_pad != B:
        pad = b_pad - B
        x_flat = jnp.pad(x_flat, ((0, pad), (0, 0)))
        tp_full = jnp.pad(tp_full, ((0, pad), (0, 0)))

    out_flat = pl.pallas_call(
        _res_cheb_gc_diff_kernel,
        out_shape=jax.ShapeDtypeStruct((b_pad, N * Cout), x.dtype),
        grid=(num_tiles,),
        in_specs=[
            pl.BlockSpec((Bt, N * Cin), lambda i: (i, 0)),      # x batch tile
            pl.BlockSpec((Bt, N * hid), lambda i: (i, 0)),      # temb projection tile
            pl.BlockSpec((N * Cin, N * hid), lambda i: (0, 0)),  # fused W1 (basis folded in)
            pl.BlockSpec((1, N * hid), lambda i: (0, 0)),        # node-tiled b1
            pl.BlockSpec((N * hid, N * Cout), lambda i: (0, 0)),  # fused W2
            pl.BlockSpec((1, N * Cout), lambda i: (0, 0)),        # node-tiled b2
        ],
        out_specs=pl.BlockSpec((Bt, N * Cout), lambda i: (i, 0)),
        compiler_params=pltpu.CompilerParams(
            dimension_semantics=("parallel",)),
    )(x_flat, tp_full, wf1, b1_full, wf2, b2_full)

    return out_flat[:B].reshape(B, N, Cout)


# ----------------------------------------------------------------------------
# Pure-JAX reference for validation.
# ----------------------------------------------------------------------------
def ref_forward(x, temb, adj, params):
    w1, b1, wt, bt_lin, w2, b2 = params
    K = w1.shape[0]
    mul_L = cheb_basis(adj, K)

    def cheb_conv(inp, w, bias):
        r = jnp.einsum('knm,bmc->kbnc', mul_L, inp)
        r = jnp.einsum('kbnc,kcd->bnd', r, w)
        return r + bias[None, None, :]

    h = jax.nn.relu(cheb_conv(x, w1, b1))
    tp = (temb * jax.nn.sigmoid(temb)) @ wt + bt_lin
    h = h + tp[:, None, :]
    o = jax.nn.relu(cheb_conv(h, w2, b2))
    return x + o


if __name__ == "__main__":
    # Small shapes consistent with the module: B=2 batch, N=16 graph nodes,
    # input_dim=output_dim=32 (residual requires equality), hid_dim=32,
    # emd_dim=64, K=3 Chebyshev orders.
    B, N, Cin, hid, Cout, E, K = 2, 16, 32, 32, 32, 64, 3

    key = jax.random.PRNGKey(0)
    k_adj, k_x, k_t, k_w1, k_wt, k_w2 = jax.random.split(key, 6)

    # symmetric adjacency with self-loops (positive degrees).
    a = (jax.random.uniform(k_adj, (N, N)) > 0.6).astype(jnp.float32)
    adj = jnp.minimum(a + a.T, 1.0) + jnp.eye(N, dtype=jnp.float32)

    x = jax.random.normal(k_x, (B, N, Cin), dtype=jnp.float32)
    temb = jax.random.normal(k_t, (B, E), dtype=jnp.float32)

    # Deterministic parameter init (Xavier-ish scale; ChebConv weight is (K, in, out)).
    w1 = jax.random.normal(k_w1, (K, Cin, hid), dtype=jnp.float32) * (2.0 / (Cin + hid)) ** 0.5
    b1 = jnp.zeros((hid,), dtype=jnp.float32)
    wt = jax.random.normal(k_wt, (E, hid), dtype=jnp.float32) * (1.0 / E) ** 0.5
    bt_lin = jnp.zeros((hid,), dtype=jnp.float32)
    w2 = jax.random.normal(k_w2, (K, hid, Cout), dtype=jnp.float32) * (2.0 / (hid + Cout)) ** 0.5
    b2 = jnp.zeros((Cout,), dtype=jnp.float32)
    params = (w1, b1, wt, bt_lin, w2, b2)

    # f32 operands for the correctness test (bf16 default is the production path).
    out = res_cheb_gc_diff(x, temb, adj, params, compute_dtype=jnp.float32)
    out = jax.block_until_ready(out)

    ref = ref_forward(x, temb, adj, params)
    assert out.shape == (B, N, Cout)
    err = float(jnp.max(jnp.abs(out - ref)))
    assert jnp.allclose(out, ref, atol=1e-4, rtol=1e-4), err

    print("KERNEL_OK")
</pallas_src>

<mosaic_0001>
module attributes {stable_mosaic.version = 11 : i64} {
  func.func @_res_cheb_gc_diff_kernel(%arg0: i32, %arg1: memref<2x512xf32, #tpu.memory_space<vmem>>, %arg2: memref<2x512xf32, #tpu.memory_space<vmem>>, %arg3: memref<512x512xf32, #tpu.memory_space<vmem>>, %arg4: memref<1x512xf32, #tpu.memory_space<vmem>>, %arg5: memref<512x512xf32, #tpu.memory_space<vmem>>, %arg6: memref<1x512xf32, #tpu.memory_space<vmem>>, %arg7: memref<2x512xf32, #tpu.memory_space<vmem>>) attributes {dimension_semantics = [#tpu.dimension_semantics<parallel>], iteration_bounds = array<i64: 1>, scalar_prefetch = 0 : i64, scratch_operands = 0 : i64, tpu.core_type = #tpu.core_type<tc>, window_params = [{transform_indices = @transform_0, window_bounds = array<i64: 2, 512>}, {transform_indices = @transform_1, window_bounds = array<i64: 2, 512>}, {pipeline_mode = #tpu.pipeline_mode<synchronous>, transform_indices = @transform_2, window_bounds = array<i64: 512, 512>}, {pipeline_mode = #tpu.pipeline_mode<synchronous>, transform_indices = @transform_3, window_bounds = array<i64: 1, 512>}, {pipeline_mode = #tpu.pipeline_mode<synchronous>, transform_indices = @transform_4, window_bounds = array<i64: 512, 512>}, {pipeline_mode = #tpu.pipeline_mode<synchronous>, transform_indices = @transform_5, window_bounds = array<i64: 1, 512>}, {transform_indices = @transform_6, window_bounds = array<i64: 2, 512>}]} {
    %c0 = arith.constant 0 : index
    %c0_0 = arith.constant 0 : index
    %0 = vector.load %arg1[%c0, %c0_0] : memref<2x512xf32, #tpu.memory_space<vmem>>, vector<2x512xf32>
    %c0_1 = arith.constant 0 : index
    %c0_2 = arith.constant 0 : index
    %1 = vector.load %arg3[%c0_1, %c0_2] : memref<512x512xf32, #tpu.memory_space<vmem>>, vector<512x512xf32>
    %cst = arith.constant dense<0.000000e+00> : vector<2x512xf32>
    %2 = tpu.matmul %0, %1, %cst {dimension_numbers = #tpu.dot_dimension_numbers<[1], [0], [0], [1], [0, 0, 1, 1], [], []>} : vector<2x512xf32>, vector<512x512xf32>, vector<2x512xf32> -> vector<2x512xf32>
    %c0_3 = arith.constant 0 : index
    %c0_4 = arith.constant 0 : index
    %3 = vector.load %arg4[%c0_3, %c0_4] : memref<1x512xf32, #tpu.memory_space<vmem>>, vector<1x512xf32>
    %4 = vector.broadcast %3 : vector<1x512xf32> to vector<2x512xf32>
    %5 = arith.addf %2, %4 : vector<2x512xf32>
    %cst_5 = arith.constant 0.000000e+00 : f32
    %6 = vector.broadcast %cst_5 : f32 to vector<2x512xf32>
    %7 = arith.maximumf %5, %6 : vector<2x512xf32>
    %c0_6 = arith.constant 0 : index
    %c0_7 = arith.constant 0 : index
    %8 = vector.load %arg2[%c0_6, %c0_7] : memref<2x512xf32, #tpu.memory_space<vmem>>, vector<2x512xf32>
    %9 = arith.addf %7, %8 : vector<2x512xf32>
    %c0_8 = arith.constant 0 : index
    %c0_9 = arith.constant 0 : index
    %10 = vector.load %arg5[%c0_8, %c0_9] : memref<512x512xf32, #tpu.memory_space<vmem>>, vector<512x512xf32>
    %cst_10 = arith.constant dense<0.000000e+00> : vector<2x512xf32>
    %11 = tpu.matmul %9, %10, %cst_10 {dimension_numbers = #tpu.dot_dimension_numbers<[1], [0], [0], [1], [0, 0, 1, 1], [], []>} : vector<2x512xf32>, vector<512x512xf32>, vector<2x512xf32> -> vector<2x512xf32>
    %c0_11 = arith.constant 0 : index
    %c0_12 = arith.constant 0 : index
    %12 = vector.load %arg6[%c0_11, %c0_12] : memref<1x512xf32, #tpu.memory_space<vmem>>, vector<1x512xf32>
    %13 = vector.broadcast %12 : vector<1x512xf32> to vector<2x512xf32>
    %14 = arith.addf %11, %13 : vector<2x512xf32>
    %cst_13 = arith.constant 0.000000e+00 : f32
    %15 = vector.broadcast %cst_13 : f32 to vector<2x512xf32>
    %16 = arith.maximumf %14, %15 : vector<2x512xf32>
    %17 = arith.addf %0, %16 : vector<2x512xf32>
    %c0_14 = arith.constant 0 : index
    %c0_15 = arith.constant 0 : index
    %18 = vector.load %arg7[%c0_14, %c0_15] : memref<2x512xf32, #tpu.memory_space<vmem>>, vector<2x512xf32>
    tpu.vector_store %arg7[%c0_14, %c0_15], %17 {strides = array<i32>} : memref<2x512xf32, #tpu.memory_space<vmem>>, vector<2x512xf32>,
    return
  }
  func.func @transform_0(%arg0: i32) -> (i32, i32) {
    %c0_i32 = arith.constant 0 : i32
    %c0_i32_0 = arith.constant 0 : i32
    return %arg0, %c0_i32 : i32, i32
  }
  func.func @transform_1(%arg0: i32) -> (i32, i32) {
    %c0_i32 = arith.constant 0 : i32
    %c0_i32_0 = arith.constant 0 : i32
    return %arg0, %c0_i32 : i32, i32
  }
  func.func @transform_2(%arg0: i32) -> (i32, i32) {
    %c0_i32 = arith.constant 0 : i32
    %c0_i32_0 = arith.constant 0 : i32
    %c0_i32_1 = arith.constant 0 : i32
    return %c0_i32, %c0_i32_0 : i32, i32
  }
  func.func @transform_3(%arg0: i32) -> (i32, i32) {
    %c0_i32 = arith.constant 0 : i32
    %c0_i32_0 = arith.constant 0 : i32
    %c0_i32_1 = arith.constant 0 : i32
    return %c0_i32, %c0_i32_0 : i32, i32
  }
  func.func @transform_4(%arg0: i32) -> (i32, i32) {
    %c0_i32 = arith.constant 0 : i32
    %c0_i32_0 = arith.constant 0 : i32
    %c0_i32_1 = arith.constant 0 : i32
    return %c0_i32, %c0_i32_0 : i32, i32
  }
  func.func @transform_5(%arg0: i32) -> (i32, i32) {
    %c0_i32 = arith.constant 0 : i32
    %c0_i32_0 = arith.constant 0 : i32
    %c0_i32_1 = arith.constant 0 : i32
    return %c0_i32, %c0_i32_0 : i32, i32
  }
  func.func @transform_6(%arg0: i32) -> (i32, i32) {
    %c0_i32 = arith.constant 0 : i32
    %c0_i32_0 = arith.constant 0 : i32
    return %arg0, %c0_i32 : i32, i32
  }
}

</mosaic_0001>

<llo_original>
// kernel: tpu_custom_call.1
$region0: #{tpu_custom_call.1}
  #allocation0 [shape = 'u32[]', space=smem, size = 0x4, offset = 0x4, fixed_abs, tag = 'smem constant byte address 0x4 - core index']
  #allocation1 [shape = 'u32[144,128]{1,0:T(1,128)}', space=vmem, size = 0x12000, scoped, tag = 'internal scratch']
  %s0 = inlined_call_operand.hbm [shape: f32[2,512], index: 0, kind: input, shape index: {}]
  %s1 = inlined_call_operand.hbm [shape: f32[2,512], index: 1, kind: input, shape index: {}]
  %s2 = inlined_call_operand.hbm [shape: f32[512,512], index: 2, kind: input, shape index: {}]
  %s3 = inlined_call_operand.vmem [shape: f32[1,512], index: 3, kind: input, shape index: {}]
  %s4 = inlined_call_operand.hbm [shape: f32[512,512], index: 4, kind: input, shape index: {}]
  %s5 = inlined_call_operand.vmem [shape: f32[1,512], index: 5, kind: input, shape index: {}]
  %s6 = inlined_call_operand.hbm [shape: f32[2,512], index: 6, kind: output, shape index: {}]
  %s7 = sld [smem:[#allocation0]]
  $region50: #{tpu_custom_call.1} parent=0
    _
  %s9 = ssub.s32 1, %s7
  %s10 = scalar_select 0, %s9, %s7
  $region1: #{tpu_custom_call.1} parent=0
    #allocation2 [shape = 'u8[4096]{0}', space=vmem, size = 0x1000, scoped, tag = 'input window, operand 0, single buffered']
    #allocation3 [shape = 's32[1]{0}', space=sflag, size = 0x4, scoped, tag = 'scoped memory for tpu_custom_call.1']
    #allocation4 [shape = 's32[1]{0}', space=sflag, size = 0x4, scoped, tag = 'scoped memory for tpu_custom_call.1']
    #allocation5 [shape = 'u8[4096]{0}', space=vmem, size = 0x1000, scoped, tag = 'input window, operand 1, single buffered']
    #allocation6 [shape = 's32[1]{0}', space=sflag, size = 0x4, scoped, tag = 'scoped memory for tpu_custom_call.1']
    #allocation7 [shape = 'u8[1048576]{0}', space=vmem, size = 0x100000, scoped, tag = 'input window, operand 2, single buffered']
    #allocation8 [shape = 'u8[1048576]{0}', space=vmem, size = 0x100000, scoped, tag = 'input window, operand 4, single buffered']
    #allocation9 [shape = 's32[1]{0}', space=sflag, size = 0x4, scoped, tag = 'scoped memory for tpu_custom_call.1']
    #allocation10 [shape = 'u8[4096]{0}', space=vmem, size = 0x1000, scoped, tag = 'output window, operand 0, single buffered']
    %11 = vsyncpa [#allocation3], 0
    %12 = vsyncpa [#allocation6], 0
    %13 = vsyncpa [#allocation9], 0
    %14 = vsyncpa [#allocation4], 0
    // Predicated region
    $region2: #{tpu_custom_call.1} parent=1 // pred_check
      _
    $region3: #{tpu_custom_call.1} parent=1 // pred_check_branch
      %16 = sbr.rel (0) target = $region5
    $region4: #{tpu_custom_call.1} parent=1 // pred_region
      %s18 = ssub.s32 128, 128
      %19 = vsyncadd [#allocation3], %s18
      %s21 = sshll.u32 [#allocation2], 4
      %s22 = int_to_ptr.vmem [resolvable:$true] %s21
      %24 = dma.hbm_to_vmem [thread:$0]  %s0, 128, %s22, [#allocation3]
    $region5: #{tpu_custom_call.1} parent=1 // pred_fallthru
      _
    // Predicated region
    $region6: #{tpu_custom_call.1} parent=1 // pred_check
      _
    $region7: #{tpu_custom_call.1} parent=1 // pred_check_branch
      %26 = sbr.rel (0) target = $region9
    $region8: #{tpu_custom_call.1} parent=1 // pred_region
      %s28 = ssub.s32 128, 128
      %29 = vsyncadd [#allocation6], %s28
      %s31 = sshll.u32 [#allocation5], 4
      %s32 = int_to_ptr.vmem [resolvable:$true] %s31
      %34 = dma.hbm_to_vmem [thread:$0]  %s1, 128, %s32, [#allocation6]
    $region9: #{tpu_custom_call.1} parent=1 // pred_fallthru
      _
    // Predicated region
    $region10: #{tpu_custom_call.1} parent=1 // pred_check
      _
    $region11: #{tpu_custom_call.1} parent=1 // pred_check_branch
      %36 = sbr.rel (0) target = $region13
    $region12: #{tpu_custom_call.1} parent=1 // pred_region
      %s38 = ssub.s32 32768, 32768
      %39 = vsyncadd [#allocation6], %s38
      %s40 = sshll.u32 [#allocation7], 4
      %s41 = int_to_ptr.vmem [resolvable:$true] %s40
      %46 = dma.hbm_to_vmem [thread:$0]  %s2, 32768, %s41, [#allocation6], 512, 512, 32
    $region13: #{tpu_custom_call.1} parent=1 // pred_fallthru
      _
    // Predicated region
    $region14: #{tpu_custom_call.1} parent=1 // pred_check
      _
    $region15: #{tpu_custom_call.1} parent=1 // pred_check_branch
      %48 = sbr.rel (0) target = $region17
    $region16: #{tpu_custom_call.1} parent=1 // pred_region
      _
    $region17: #{tpu_custom_call.1} parent=1 // pred_fallthru
      _
    // Predicated region
    $region18: #{tpu_custom_call.1} parent=1 // pred_check
      _
    $region19: #{tpu_custom_call.1} parent=1 // pred_check_branch
      %50 = sbr.rel (0) target = $region21
    $region20: #{tpu_custom_call.1} parent=1 // pred_region
      %s52 = ssub.s32 32768, 32768
      %53 = vsyncadd [#allocation9], %s52
      %s54 = sshll.u32 [#allocation8], 4
      %s55 = int_to_ptr.vmem [resolvable:$true] %s54
      %60 = dma.hbm_to_vmem [thread:$0]  %s4, 32768, %s55, [#allocation9], 512, 512, 32
    $region21: #{tpu_custom_call.1} parent=1 // pred_fallthru
      _
    // Predicated region
    $region22: #{tpu_custom_call.1} parent=1 // pred_check
      _
    $region23: #{tpu_custom_call.1} parent=1 // pred_check_branch
      %62 = sbr.rel (0) target = $region25
    $region24: #{tpu_custom_call.1} parent=1 // pred_region
      _
    $region25: #{tpu_custom_call.1} parent=1 // pred_fallthru
      _
    // Predicated region
    $region26: #{tpu_custom_call.1} parent=1 // pred_check
      _
    $region27: #{tpu_custom_call.1} parent=1 // pred_check_branch
      %64 = sbr.rel (0) target = $region29
    $region28: #{tpu_custom_call.1} parent=1 // pred_region
      %65 = dma.done [#allocation3], 128
    $region29: #{tpu_custom_call.1} parent=1 // pred_fallthru
      _
    // Predicated region
    $region30: #{tpu_custom_call.1} parent=1 // pred_check
      _
    $region31: #{tpu_custom_call.1} parent=1 // pred_check_branch
      %67 = sbr.rel (0) target = $region33
    $region32: #{tpu_custom_call.1} parent=1 // pred_region
      %68 = dma.done [#allocation6], 128
    $region33: #{tpu_custom_call.1} parent=1 // pred_fallthru
      _
    // Predicated region
    $region34: #{tpu_custom_call.1} parent=1 // pred_check
      _
    $region35: #{tpu_custom_call.1} parent=1 // pred_check_branch
      %70 = sbr.rel (0) target = $region37
    $region36: #{tpu_custom_call.1} parent=1 // pred_region
      %71 = dma.done [#allocation6], 32768
    $region37: #{tpu_custom_call.1} parent=1 // pred_fallthru
      _
    // Predicated region
    $region38: #{tpu_custom_call.1} parent=1 // pred_check
      _
    $region39: #{tpu_custom_call.1} parent=1 // pred_check_branch
      %73 = sbr.rel (0) target = $region41
    $region40: #{tpu_custom_call.1} parent=1 // pred_region
      %74 = dma.done [#allocation9], 32768
    $region41: #{tpu_custom_call.1} parent=1 // pred_fallthru
      _
    %v75 = vld [vmem:[#allocation2] sm:$0xff]
    %v76 = vld [vmem:[#allocation7] sm:$0xff]
    %v77 = vld [vmem:[#allocation7 + $0x8] sm:$0xff]
    %v78 = vld [vmem:[#allocation7 + $0x10] sm:$0xff]
    %v79 = vld [vmem:[#allocation7 + $0x18] sm:$0xff]
    %v80 = vld [vmem:[#allocation7 + $0x20] sm:$0xff]
    %v81 = vld [vmem:[#allocation7 + $0x28] sm:$0xff]
    %v82 = vld [vmem:[#allocation7 + $0x30] sm:$0xff]
    %v83 = vld [vmem:[#allocation7 + $0x38] sm:$0xff]
    %v84 = vld [vmem:[#allocation7 + $0x40] sm:$0xff]
    %v85 = vld [vmem:[#allocation7 + $0x48] sm:$0xff]
    %v86 = vld [vmem:[#allocation7 + $0x50] sm:$0xff]
    %v87 = vld [vmem:[#allocation7 + $0x58] sm:$0xff]
    %v88 = vld [vmem:[#allocation7 + $0x60] sm:$0xff]
    %v89 = vld [vmem:[#allocation7 + $0x68] sm:$0xff]
    %v90 = vld [vmem:[#allocation7 + $0x70] sm:$0xff]
    %v91 = vld [vmem:[#allocation7 + $0x78] sm:$0xff]
    %v92 = vld [vmem:[#allocation7 + $0x80] sm:$0xff]
    %v93 = vld [vmem:[#allocation7 + $0x88] sm:$0xff]
    %v94 = vld [vmem:[#allocation7 + $0x90] sm:$0xff]
    %v95 = vld [vmem:[#allocation7 + $0x98] sm:$0xff]
    %v96 = vld [vmem:[#allocation7 + $0xa0] sm:$0xff]
    %v97 = vld [vmem:[#allocation7 + $0xa8] sm:$0xff]
    %v98 = vld [vmem:[#allocation7 + $0xb0] sm:$0xff]
    %v99 = vld [vmem:[#allocation7 + $0xb8] sm:$0xff]
    %v100 = vld [vmem:[#allocation7 + $0xc0] sm:$0xff]
    %v101 = vld [vmem:[#allocation7 + $0xc8] sm:$0xff]
    %v102 = vld [vmem:[#allocation7 + $0xd0] sm:$0xff]
    %v103 = vld [vmem:[#allocation7 + $0xd8] sm:$0xff]
    %v104 = vld [vmem:[#allocation7 + $0xe0] sm:$0xff]
    %v105 = vld [vmem:[#allocation7 + $0xe8] sm:$0xff]
    %v106 = vld [vmem:[#allocation7 + $0xf0] sm:$0xff]
    %v107 = vld [vmem:[#allocation7 + $0xf8] sm:$0xff]
    %v108 = vld [vmem:[#allocation7 + $0x100] sm:$0xff]
    %v109 = vld [vmem:[#allocation7 + $0x108] sm:$0xff]
    %v110 = vld [vmem:[#allocation7 + $0x110] sm:$0xff]
    %v111 = vld [vmem:[#allocation7 + $0x118] sm:$0xff]
    %v112 = vld [vmem:[#allocation7 + $0x120] sm:$0xff]
    %v113 = vld [vmem:[#allocation7 + $0x128] sm:$0xff]
    %v114 = vld [vmem:[#allocation7 + $0x130] sm:$0xff]
    %v115 = vld [vmem:[#allocation7 + $0x138] sm:$0xff]
    %v116 = vld [vmem:[#allocation7 + $0x140] sm:$0xff]
    %v117 = vld [vmem:[#allocation7 + $0x148] sm:$0xff]
    %v118 = vld [vmem:[#allocation7 + $0x150] sm:$0xff]
    %v119 = vld [vmem:[#allocation7 + $0x158] sm:$0xff]
    %v120 = vld [vmem:[#allocation7 + $0x160] sm:$0xff]
    %v121 = vld [vmem:[#allocation7 + $0x168] sm:$0xff]
    %v122 = vld [vmem:[#allocation7 + $0x170] sm:$0xff]
    %v123 = vld [vmem:[#allocation7 + $0x178] sm:$0xff]
    %v124 = vld [vmem:[#allocation7 + $0x180] sm:$0xff]
    %v125 = vld [vmem:[#allocation7 + $0x188] sm:$0xff]
    %v126 = vld [vmem:[#allocation7 + $0x190] sm:$0xff]
    %v127 = vld [vmem:[#allocation7 + $0x198] sm:$0xff]
    %v128 = vld [vmem:[#allocation7 + $0x1a0] sm:$0xff]
    %v129 = vld [vmem:[#allocation7 + $0x1a8] sm:$0xff]
    %v130 = vld [vmem:[#allocation7 + $0x1b0] sm:$0xff]
    %v131 = vld [vmem:[#allocation7 + $0x1b8] sm:$0xff]
    %v132 = vld [vmem:[#allocation7 + $0x1c0] sm:$0xff]
    %v133 = vld [vmem:[#allocation7 + $0x1c8] sm:$0xff]
    %v134 = vld [vmem:[#allocation7 + $0x1d0] sm:$0xff]
    %v135 = vld [vmem:[#allocation7 + $0x1d8] sm:$0xff]
    %v136 = vld [vmem:[#allocation7 + $0x1e0] sm:$0xff]
    %v137 = vld [vmem:[#allocation7 + $0x1e8] sm:$0xff]
    %v138 = vld [vmem:[#allocation7 + $0x1f0] sm:$0xff]
    %v139 = vld [vmem:[#allocation7 + $0x1f8] sm:$0xff]
    %v140 = vld [vmem:[#allocation7 + $0x200] sm:$0xff]
    %v141 = vld [vmem:[#allocation7 + $0x208] sm:$0xff]
    %v142 = vld [vmem:[#allocation7 + $0x210] sm:$0xff]
    %v143 = vld [vmem:[#allocation7 + $0x218] sm:$0xff]
    %v144 = vld [vmem:[#allocation7 + $0x220] sm:$0xff]
    %v145 = vld [vmem:[#allocation7 + $0x228] sm:$0xff]
    %v146 = vld [vmem:[#allocation7 + $0x230] sm:$0xff]
    %v147 = vld [vmem:[#allocation7 + $0x238] sm:$0xff]
    %v148 = vld [vmem:[#allocation7 + $0x240] sm:$0xff]
    %v149 = vld [vmem:[#allocation7 + $0x248] sm:$0xff]
    %v150 = vld [vmem:[#allocation7 + $0x250] sm:$0xff]
    %v151 = vld [vmem:[#allocation7 + $0x258] sm:$0xff]
    %v152 = vld [vmem:[#allocation7 + $0x260] sm:$0xff]
    %v153 = vld [vmem:[#allocation7 + $0x268] sm:$0xff]
    %v154 = vld [vmem:[#allocation7 + $0x270] sm:$0xff]
    %v155 = vld [vmem:[#allocation7 + $0x278] sm:$0xff]
    %v156 = vld [vmem:[#allocation7 + $0x280] sm:$0xff]
    %v157 = vld [vmem:[#allocation7 + $0x288] sm:$0xff]
    %v158 = vld [vmem:[#allocation7 + $0x290] sm:$0xff]
    %v159 = vld [vmem:[#allocation7 + $0x298] sm:$0xff]
    %v160 = vld [vmem:[#allocation7 + $0x2a0] sm:$0xff]
    %v161 = vld [vmem:[#allocation7 + $0x2a8] sm:$0xff]
    %v162 = vld [vmem:[#allocation7 + $0x2b0] sm:$0xff]
    %v163 = vld [vmem:[#allocation7 + $0x2b8] sm:$0xff]
    %v164 = vld [vmem:[#allocation7 + $0x2c0] sm:$0xff]
    %v165 = vld [vmem:[#allocation7 + $0x2c8] sm:$0xff]
    %v166 = vld [vmem:[#allocation7 + $0x2d0] sm:$0xff]
    %v167 = vld [vmem:[#allocation7 + $0x2d8] sm:$0xff]
    %v168 = vld [vmem:[#allocation7 + $0x2e0] sm:$0xff]
    %v169 = vld [vmem:[#allocation7 + $0x2e8] sm:$0xff]
    %v170 = vld [vmem:[#allocation7 + $0x2f0] sm:$0xff]
    %v171 = vld [vmem:[#allocation7 + $0x2f8] sm:$0xff]
    %v172 = vld [vmem:[#allocation7 + $0x300] sm:$0xff]
    %v173 = vld [vmem:[#allocation7 + $0x308] sm:$0xff]
    %v174 = vld [vmem:[#allocation7 + $0x310] sm:$0xff]
    %v175 = vld [vmem:[#allocation7 + $0x318] sm:$0xff]
    %v176 = vld [vmem:[#allocation7 + $0x320] sm:$0xff]
    %v177 = vld [vmem:[#allocation7 + $0x328] sm:$0xff]
    %v178 = vld [vmem:[#allocation7 + $0x330] sm:$0xff]
    %v179 = vld [vmem:[#allocation7 + $0x338] sm:$0xff]
    %v180 = vld [vmem:[#allocation7 + $0x340] sm:$0xff]
    %v181 = vld [vmem:[#allocation7 + $0x348] sm:$0xff]
    %v182 = vld [vmem:[#allocation7 + $0x350] sm:$0xff]
    %v183 = vld [vmem:[#allocation7 + $0x358] sm:$0xff]
    %v184 = vld [vmem:[#allocation7 + $0x360] sm:$0xff]
    %v185 = vld [vmem:[#allocation7 + $0x368] sm:$0xff]
    %v186 = vld [vmem:[#allocation7 + $0x370] sm:$0xff]
    %v187 = vld [vmem:[#allocation7 + $0x378] sm:$0xff]
    %v188 = vld [vmem:[#allocation7 + $0x380] sm:$0xff]
    %v189 = vld [vmem:[#allocation7 + $0x388] sm:$0xff]
    %v190 = vld [vmem:[#allocation7 + $0x390] sm:$0xff]
    %v191 = vld [vmem:[#allocation7 + $0x398] sm:$0xff]
    %v192 = vld [vmem:[#allocation7 + $0x3a0] sm:$0xff]
    %v193 = vld [vmem:[#allocation7 + $0x3a8] sm:$0xff]
    %v194 = vld [vmem:[#allocation7 + $0x3b0] sm:$0xff]
    %v195 = vld [vmem:[#allocation7 + $0x3b8] sm:$0xff]
    %v196 = vld [vmem:[#allocation7 + $0x3c0] sm:$0xff]
    %v197 = vld [vmem:[#allocation7 + $0x3c8] sm:$0xff]
    %v198 = vld [vmem:[#allocation7 + $0x3d0] sm:$0xff]
    %v199 = vld [vmem:[#allocation7 + $0x3d8] sm:$0xff]
    %v200 = vld [vmem:[#allocation7 + $0x3e0] sm:$0xff]
    %v201 = vld [vmem:[#allocation7 + $0x3e8] sm:$0xff]
    %v202 = vld [vmem:[#allocation7 + $0x3f0] sm:$0xff]
    %v203 = vld [vmem:[#allocation7 + $0x3f8] sm:$0xff]
    %v204 = vld [vmem:[#allocation7 + $0x400] sm:$0xff]
    %v205 = vld [vmem:[#allocation7 + $0x408] sm:$0xff]
    %v206 = vld [vmem:[#allocation7 + $0x410] sm:$0xff]
    %v207 = vld [vmem:[#allocation7 + $0x418] sm:$0xff]
    %v208 = vld [vmem:[#allocation7 + $0x420] sm:$0xff]
    %v209 = vld [vmem:[#allocation7 + $0x428] sm:$0xff]
    %v210 = vld [vmem:[#allocation7 + $0x430] sm:$0xff]
    %v211 = vld [vmem:[#allocation7 + $0x438] sm:$0xff]
    %v212 = vld [vmem:[#allocation7 + $0x440] sm:$0xff]
    %v213 = vld [vmem:[#allocation7 + $0x448] sm:$0xff]
    %v214 = vld [vmem:[#allocation7 + $0x450] sm:$0xff]
    %v215 = vld [vmem:[#allocation7 + $0x458] sm:$0xff]
    %v216 = vld [vmem:[#allocation7 + $0x460] sm:$0xff]
    %v217 = vld [vmem:[#allocation7 + $0x468] sm:$0xff]
    %v218 = vld [vmem:[#allocation7 + $0x470] sm:$0xff]
    %v219 = vld [vmem:[#allocation7 + $0x478] sm:$0xff]
    %v220 = vld [vmem:[#allocation7 + $0x480] sm:$0xff]
    %v221 = vld [vmem:[#allocation7 + $0x488] sm:$0xff]
    %v222 = vld [vmem:[#allocation7 + $0x490] sm:$0xff]
    %v223 = vld [vmem:[#allocation7 + $0x498] sm:$0xff]
    %v224 = vld [vmem:[#allocation7 + $0x4a0] sm:$0xff]
    %v225 = vld [vmem:[#allocation7 + $0x4a8] sm:$0xff]
    %v226 = vld [vmem:[#allocation7 + $0x4b0] sm:$0xff]
    %v227 = vld [vmem:[#allocation7 + $0x4b8] sm:$0xff]
    %v228 = vld [vmem:[#allocation7 + $0x4c0] sm:$0xff]
    %v229 = vld [vmem:[#allocation7 + $0x4c8] sm:$0xff]
    %v230 = vld [vmem:[#allocation7 + $0x4d0] sm:$0xff]
    %v231 = vld [vmem:[#allocation7 + $0x4d8] sm:$0xff]
    %v232 = vld [vmem:[#allocation7 + $0x4e0] sm:$0xff]
    %v233 = vld [vmem:[#allocation7 + $0x4e8] sm:$0xff]
    %v234 = vld [vmem:[#allocation7 + $0x4f0] sm:$0xff]
    %v235 = vld [vmem:[#allocation7 + $0x4f8] sm:$0xff]
    %v236 = vld [vmem:[#allocation7 + $0x500] sm:$0xff]
    %v237 = vld [vmem:[#allocation7 + $0x508] sm:$0xff]
    %v238 = vld [vmem:[#allocation7 + $0x510] sm:$0xff]
    %v239 = vld [vmem:[#allocation7 + $0x518] sm:$0xff]
    %v240 = vld [vmem:[#allocation7 + $0x520] sm:$0xff]
    %v241 = vld [vmem:[#allocation7 + $0x528] sm:$0xff]
    %v242 = vld [vmem:[#allocation7 + $0x530] sm:$0xff]
    %v243 = vld [vmem:[#allocation7 + $0x538] sm:$0xff]
    %v244 = vld [vmem:[#allocation7 + $0x540] sm:$0xff]
    %v245 = vld [vmem:[#allocation7 + $0x548] sm:$0xff]
    %v246 = vld [vmem:[#allocation7 + $0x550] sm:$0xff]
    %v247 = vld [vmem:[#allocation7 + $0x558] sm:$0xff]
    %v248 = vld [vmem:[#allocation7 + $0x560] sm:$0xff]
    %v249 = vld [vmem:[#allocation7 + $0x568] sm:$0xff]
    %v250 = vld [vmem:[#allocation7 + $0x570] sm:$0xff]
    %v251 = vld [vmem:[#allocation7 + $0x578] sm:$0xff]
    %v252 = vld [vmem:[#allocation7 + $0x580] sm:$0xff]
    %v253 = vld [vmem:[#allocation7 + $0x588] sm:$0xff]
    %v254 = vld [vmem:[#allocation7 + $0x590] sm:$0xff]
    %v255 = vld [vmem:[#allocation7 + $0x598] sm:$0xff]
    %v256 = vld [vmem:[#allocation7 + $0x5a0] sm:$0xff]
    %v257 = vld [vmem:[#allocation7 + $0x5a8] sm:$0xff]
    %v258 = vld [vmem:[#allocation7 + $0x5b0] sm:$0xff]
    %v259 = vld [vmem:[#allocation7 + $0x5b8] sm:$0xff]
    %v260 = vld [vmem:[#allocation7 + $0x5c0] sm:$0xff]
    %v261 = vld [vmem:[#allocation7 + $0x5c8] sm:$0xff]
    %v262 = vld [vmem:[#allocation7 + $0x5d0] sm:$0xff]
    %v263 = vld [vmem:[#allocation7 + $0x5d8] sm:$0xff]
    %v264 = vld [vmem:[#allocation7 + $0x5e0] sm:$0xff]
    %v265 = vld [vmem:[#allocation7 + $0x5e8] sm:$0xff]
    %v266 = vld [vmem:[#allocation7 + $0x5f0] sm:$0xff]
    %v267 = vld [vmem:[#allocation7 + $0x5f8] sm:$0xff]
    %v268 = vld [vmem:[#allocation7 + $0x600] sm:$0xff]
    %v269 = vld [vmem:[#allocation7 + $0x608] sm:$0xff]
    %v270 = vld [vmem:[#allocation7 + $0x610] sm:$0xff]
    %v271 = vld [vmem:[#allocation7 + $0x618] sm:$0xff]
    %v272 = vld [vmem:[#allocation7 + $0x620] sm:$0xff]
    %v273 = vld [vmem:[#allocation7 + $0x628] sm:$0xff]
    %v274 = vld [vmem:[#allocation7 + $0x630] sm:$0xff]
    %v275 = vld [vmem:[#allocation7 + $0x638] sm:$0xff]
    %v276 = vld [vmem:[#allocation7 + $0x640] sm:$0xff]
    %v277 = vld [vmem:[#allocation7 + $0x648] sm:$0xff]
    %v278 = vld [vmem:[#allocation7 + $0x650] sm:$0xff]
    %v279 = vld [vmem:[#allocation7 + $0x658] sm:$0xff]
    %v280 = vld [vmem:[#allocation7 + $0x660] sm:$0xff]
    %v281 = vld [vmem:[#allocation7 + $0x668] sm:$0xff]
    %v282 = vld [vmem:[#allocation7 + $0x670] sm:$0xff]
    %v283 = vld [vmem:[#allocation7 + $0x678] sm:$0xff]
    %v284 = vld [vmem:[#allocation7 + $0x680] sm:$0xff]
    %v285 = vld [vmem:[#allocation7 + $0x688] sm:$0xff]
    %v286 = vld [vmem:[#allocation7 + $0x690] sm:$0xff]
    %v287 = vld [vmem:[#allocation7 + $0x698] sm:$0xff]
    %v288 = vld [vmem:[#allocation7 + $0x6a0] sm:$0xff]
    %v289 = vld [vmem:[#allocation7 + $0x6a8] sm:$0xff]
    %v290 = vld [vmem:[#allocation7 + $0x6b0] sm:$0xff]
    %v291 = vld [vmem:[#allocation7 + $0x6b8] sm:$0xff]
    %v292 = vld [vmem:[#allocation7 + $0x6c0] sm:$0xff]
    %v293 = vld [vmem:[#allocation7 + $0x6c8] sm:$0xff]
    %v294 = vld [vmem:[#allocation7 + $0x6d0] sm:$0xff]
    %v295 = vld [vmem:[#allocation7 + $0x6d8] sm:$0xff]
    %v296 = vld [vmem:[#allocation7 + $0x6e0] sm:$0xff]
    %v297 = vld [vmem:[#allocation7 + $0x6e8] sm:$0xff]
    %v298 = vld [vmem:[#allocation7 + $0x6f0] sm:$0xff]
    %v299 = vld [vmem:[#allocation7 + $0x6f8] sm:$0xff]
    %v300 = vld [vmem:[#allocation7 + $0x700] sm:$0xff]
    %v301 = vld [vmem:[#allocation7 + $0x708] sm:$0xff]
    %v302 = vld [vmem:[#allocation7 + $0x710] sm:$0xff]
    %v303 = vld [vmem:[#allocation7 + $0x718] sm:$0xff]
    %v304 = vld [vmem:[#allocation7 + $0x720] sm:$0xff]
    %v305 = vld [vmem:[#allocation7 + $0x728] sm:$0xff]
    %v306 = vld [vmem:[#allocation7 + $0x730] sm:$0xff]
    %v307 = vld [vmem:[#allocation7 + $0x738] sm:$0xff]
    %v308 = vld [vmem:[#allocation7 + $0x740] sm:$0xff]
    %v309 = vld [vmem:[#allocation7 + $0x748] sm:$0xff]
    %v310 = vld [vmem:[#allocation7 + $0x750] sm:$0xff]
    %v311 = vld [vmem:[#allocation7 + $0x758] sm:$0xff]
    %v312 = vld [vmem:[#allocation7 + $0x760] sm:$0xff]
    %v313 = vld [vmem:[#allocation7 + $0x768] sm:$0xff]
    %v314 = vld [vmem:[#allocation7 + $0x770] sm:$0xff]
    %v315 = vld [vmem:[#allocation7 + $0x778] sm:$0xff]
    %v316 = vld [vmem:[#allocation7 + $0x780] sm:$0xff]
    %v317 = vld [vmem:[#allocation7 + $0x788] sm:$0xff]
    %v318 = vld [vmem:[#allocation7 + $0x790] sm:$0xff]
    %v319 = vld [vmem:[#allocation7 + $0x798] sm:$0xff]
    %v320 = vld [vmem:[#allocation7 + $0x7a0] sm:$0xff]
    %v321 = vld [vmem:[#allocation7 + $0x7a8] sm:$0xff]
    %v322 = vld [vmem:[#allocation7 + $0x7b0] sm:$0xff]
    %v323 = vld [vmem:[#allocation7 + $0x7b8] sm:$0xff]
    %v324 = vld [vmem:[#allocation7 + $0x7c0] sm:$0xff]
    %v325 = vld [vmem:[#allocation7 + $0x7c8] sm:$0xff]
    %v326 = vld [vmem:[#allocation7 + $0x7d0] sm:$0xff]
    %v327 = vld [vmem:[#allocation7 + $0x7d8] sm:$0xff]
    %v328 = vld [vmem:[#allocation7 + $0x7e0] sm:$0xff]
    %v329 = vld [vmem:[#allocation7 + $0x7e8] sm:$0xff]
    %v330 = vld [vmem:[#allocation7 + $0x7f0] sm:$0xff]
    %v331 = vld [vmem:[#allocation7 + $0x7f8] sm:$0xff]
    %v332 = vld [vmem:[%s3] sm:$0xf]
    %v334 = vlaneseq
    %v335 = vshrl.u32 %v334, 7
    %v336 = vsub.s32 0, %v335
    %v337 = vrot.slane %v332, %v336
    %v338 = vlaneseq
    %v339 = vshrl.u32 %v338, 7
    %v340 = vsub.s32 1, %v339
    %v341 = vrot.slane %v332, %v340
    %v342 = vlaneseq
    %v343 = vshrl.u32 %v342, 7
    %v344 = vsub.s32 2, %v343
    %v345 = vrot.slane %v332, %v344
    %v346 = vlaneseq
    %v347 = vshrl.u32 %v346, 7
    %v348 = vsub.s32 3, %v347
    %v349 = vrot.slane %v332, %v348
    %v355 = vcombine.high %v75, %v75
    %v357 = vunpack.c.l.s4 1983009808
    %v358 = vunpack.c.0.s8 %v357
    %v359 = vlaneseq
    %v360 = vshrl.u32 %v359, 7
    %v361 = vsub.s32 %v358, %v360
    %v362 = vrot.slane %v75, %v361
    %v364 = vunpack.c.l.s4 1983009808
    %v365 = vunpack.c.0.s8 %v364
    %v366 = vlaneseq
    %v367 = vshrl.u32 %v366, 7
    %v368 = vsub.s32 %v365, %v367
    %v369 = vrot.slane %v355, %v368
    %v370 = vcombine.high %v362, %v362
    %v371 = vcombine.high %v369, %v369
    %376 = vmatprep.subr.mxu0 %v77
    %377 = vmatpush1.msra.mxu0 %v76
    %378 = vmatprep.subr.mxu0 %v81
    %379 = vmatpush1.msra.mxu0 %v80
    %380 = vmatprep.subr.mxu0 %v85
    %381 = vmatpush1.msra.mxu0 %v84
    %382 = vmatprep.subr.mxu0 %v89
    %383 = vmatpush1.msra.mxu0 %v88
    %384 = vmatprep.subr.mxu0 %v93
    %385 = vmatpush1.msra.mxu0 %v92
    %386 = vmatprep.subr.mxu0 %v97
    %387 = vmatpush1.msra.mxu0 %v96
    %388 = vmatprep.subr.mxu0 %v101
    %389 = vmatpush1.msra.mxu0 %v100
    %390 = vmatprep.subr.mxu0 %v105
    %391 = vmatpush1.msra.mxu0 %v104
    %392 = vmatprep.subr.mxu0 %v109
    %393 = vmatpush1.msra.mxu0 %v108
    %394 = vmatprep.subr.mxu0 %v113
    %395 = vmatpush1.msra.mxu0 %v112
    %396 = vmatprep.subr.mxu0 %v117
    %397 = vmatpush1.msra.mxu0 %v116
    %398 = vmatprep.subr.mxu0 %v121
    %399 = vmatpush1.msra.mxu0 %v120
    %400 = vmatprep.subr.mxu0 %v125
    %401 = vmatpush1.msra.mxu0 %v124
    %402 = vmatprep.subr.mxu0 %v129
    %403 = vmatpush1.msra.mxu0 %v128
    %404 = vmatprep.subr.mxu0 %v133
    %405 = vmatpush1.msra.mxu0 %v132
    %406 = vmatprep.subr.mxu0 %v137
    %407 = vmatpush1.msra.mxu0 %v136
    %408 = vmatprep.subr.mxu0 %v141
    %409 = vmatpush1.msra.mxu0 %v140
    %410 = vmatprep.subr.mxu0 %v145
    %411 = vmatpush1.msra.mxu0 %v144
    %412 = vmatprep.subr.mxu0 %v149
    %413 = vmatpush1.msra.mxu0 %v148
    %414 = vmatprep.subr.mxu0 %v153
    %415 = vmatpush1.msra.mxu0 %v152
    %416 = vmatprep.subr.mxu0 %v157
    %417 = vmatpush1.msra.mxu0 %v156
    %418 = vmatprep.subr.mxu0 %v161
    %419 = vmatpush1.msra.mxu0 %v160
    %420 = vmatprep.subr.mxu0 %v165
    %421 = vmatpush1.msra.mxu0 %v164
    %422 = vmatprep.subr.mxu0 %v169
    %423 = vmatpush1.msra.mxu0 %v168
    %424 = vmatprep.subr.mxu0 %v173
    %425 = vmatpush1.msra.mxu0 %v172
    %426 = vmatprep.subr.mxu0 %v177
    %427 = vmatpush1.msra.mxu0 %v176
    %428 = vmatprep.subr.mxu0 %v181
    %429 = vmatpush1.msra.mxu0 %v180
    %430 = vmatprep.subr.mxu0 %v185
    %431 = vmatpush1.msra.mxu0 %v184
    %432 = vmatprep.subr.mxu0 %v189
    %433 = vmatpush1.msra.mxu0 %v188
    %434 = vmatprep.subr.mxu0 %v193
    %435 = vmatpush1.msra.mxu0 %v192
    %436 = vmatprep.subr.mxu0 %v197
    %437 = vmatpush1.msra.mxu0 %v196
    %438 = vmatprep.subr.mxu0 %v201
    %439 = vmatpush1.msra.mxu0 %v200
    %440 = vmatprep.mubr.f32.mxu0 %v370
    %441 = vmatmul.mubr.f32.gmra.mrb[0].mxu0 %v362
    %v442 = vpop.f32.mrb[0].mxu0
    %v443 = vadd.f32 %v337, %v442
    %v444 = vpop.f32.mrb[0].mxu0
    %v445 = vadd.f32 %v341, %v444
    %446 = vdwg.mxu0
    %447 = vmatprep.subr.mxu0 %v205
    %448 = vmatpush1.msra.mxu0 %v204
    %449 = vmatprep.subr.mxu0 %v209
    %450 = vmatpush1.msra.mxu0 %v208
    %451 = vmatprep.subr.mxu0 %v213
    %452 = vmatpush1.msra.mxu0 %v212
    %453 = vmatprep.subr.mxu0 %v217
    %454 = vmatpush1.msra.mxu0 %v216
    %455 = vmatprep.subr.mxu0 %v221
    %456 = vmatpush1.msra.mxu0 %v220
    %457 = vmatprep.subr.mxu0 %v225
    %458 = vmatpush1.msra.mxu0 %v224
    %459 = vmatprep.subr.mxu0 %v229
    %460 = vmatpush1.msra.mxu0 %v228
    %461 = vmatprep.subr.mxu0 %v233
    %462 = vmatpush1.msra.mxu0 %v232
    %463 = vmatprep.subr.mxu0 %v237
    %464 = vmatpush1.msra.mxu0 %v236
    %465 = vmatprep.subr.mxu0 %v241
    %466 = vmatpush1.msra.mxu0 %v240
    %467 = vmatprep.subr.mxu0 %v245
    %468 = vmatpush1.msra.mxu0 %v244
    %469 = vmatprep.subr.mxu0 %v249
    %470 = vmatpush1.msra.mxu0 %v248
    %471 = vmatprep.subr.mxu0 %v253
    %472 = vmatpush1.msra.mxu0 %v252
    %473 = vmatprep.subr.mxu0 %v257
    %474 = vmatpush1.msra.mxu0 %v256
    %475 = vmatprep.subr.mxu0 %v261
    %476 = vmatpush1.msra.mxu0 %v260
    %477 = vmatprep.subr.mxu0 %v265
    %478 = vmatpush1.msra.mxu0 %v264
    %479 = vmatprep.subr.mxu0 %v269
    %480 = vmatpush1.msra.mxu0 %v268
    %481 = vmatprep.subr.mxu0 %v273
    %482 = vmatpush1.msra.mxu0 %v272
    %483 = vmatprep.subr.mxu0 %v277
    %484 = vmatpush1.msra.mxu0 %v276
    %485 = vmatprep.subr.mxu0 %v281
    %486 = vmatpush1.msra.mxu0 %v280
    %487 = vmatprep.subr.mxu0 %v285
    %488 = vmatpush1.msra.mxu0 %v284
    %489 = vmatprep.subr.mxu0 %v289
    %490 = vmatpush1.msra.mxu0 %v288
    %491 = vmatprep.subr.mxu0 %v293
    %492 = vmatpush1.msra.mxu0 %v292
    %493 = vmatprep.subr.mxu0 %v297
    %494 = vmatpush1.msra.mxu0 %v296
    %495 = vmatprep.subr.mxu0 %v301
    %496 = vmatpush1.msra.mxu0 %v300
    %497 = vmatprep.subr.mxu0 %v305
    %498 = vmatpush1.msra.mxu0 %v304
    %499 = vmatprep.subr.mxu0 %v309
    %500 = vmatpush1.msra.mxu0 %v308
    %501 = vmatprep.subr.mxu0 %v313
    %502 = vmatpush1.msra.mxu0 %v312
    %503 = vmatprep.subr.mxu0 %v317
    %504 = vmatpush1.msra.mxu0 %v316
    %505 = vmatprep.subr.mxu0 %v321
    %506 = vmatpush1.msra.mxu0 %v320
    %507 = vmatprep.subr.mxu0 %v325
    %508 = vmatpush1.msra.mxu0 %v324
    %509 = vmatprep.subr.mxu0 %v329
    %510 = vmatpush1.msra.mxu0 %v328
    %511 = vmatprep.mubr.f32.mxu0 %v371
    %512 = vmatmul.mubr.f32.gmra.mrb[0].mxu0 %v369
    %v513 = vpop.f32.mrb[0].mxu0
    %v514 = vadd.f32 %v443, %v513
    %v515 = vpop.f32.mrb[0].mxu0
    %v516 = vadd.f32 %v445, %v515
    %517 = vdwg.mxu0
    %518 = vmatprep.subr.mxu0 %v79
    %519 = vmatpush1.msra.mxu0 %v78
    %520 = vmatprep.subr.mxu0 %v83
    %521 = vmatpush1.msra.mxu0 %v82
    %522 = vmatprep.subr.mxu0 %v87
    %523 = vmatpush1.msra.mxu0 %v86
    %524 = vmatprep.subr.mxu0 %v91
    %525 = vmatpush1.msra.mxu0 %v90
    %526 = vmatprep.subr.mxu0 %v95
    %527 = vmatpush1.msra.mxu0 %v94
    %528 = vmatprep.subr.mxu0 %v99
    %529 = vmatpush1.msra.mxu0 %v98
    %530 = vmatprep.subr.mxu0 %v103
    %531 = vmatpush1.msra.mxu0 %v102
    %532 = vmatprep.subr.mxu0 %v107
    %533 = vmatpush1.msra.mxu0 %v106
    %534 = vmatprep.subr.mxu0 %v111
    %535 = vmatpush1.msra.mxu0 %v110
    %536 = vmatprep.subr.mxu0 %v115
    %537 = vmatpush1.msra.mxu0 %v114
    %538 = vmatprep.subr.mxu0 %v119
    %539 = vmatpush1.msra.mxu0 %v118
    %540 = vmatprep.subr.mxu0 %v123
    %541 = vmatpush1.msra.mxu0 %v122
    %542 = vmatprep.subr.mxu0 %v127
    %543 = vmatpush1.msra.mxu0 %v126
    %544 = vmatprep.subr.mxu0 %v131
    %545 = vmatpush1.msra.mxu0 %v130
    %546 = vmatprep.subr.mxu0 %v135
    %547 = vmatpush1.msra.mxu0 %v134
    %548 = vmatprep.subr.mxu0 %v139
    %549 = vmatpush1.msra.mxu0 %v138
    %550 = vmatprep.subr.mxu0 %v143
    %551 = vmatpush1.msra.mxu0 %v142
    %552 = vmatprep.subr.mxu0 %v147
    %553 = vmatpush1.msra.mxu0 %v146
    %554 = vmatprep.subr.mxu0 %v151
    %555 = vmatpush1.msra.mxu0 %v150
    %556 = vmatprep.subr.mxu0 %v155
    %557 = vmatpush1.msra.mxu0 %v154
    %558 = vmatprep.subr.mxu0 %v159
    %559 = vmatpush1.msra.mxu0 %v158
    %560 = vmatprep.subr.mxu0 %v163
    %561 = vmatpush1.msra.mxu0 %v162
    %562 = vmatprep.subr.mxu0 %v167
    %563 = vmatpush1.msra.mxu0 %v166
    %564 = vmatprep.subr.mxu0 %v171
    %565 = vmatpush1.msra.mxu0 %v170
    %566 = vmatprep.subr.mxu0 %v175
    %567 = vmatpush1.msra.mxu0 %v174
    %568 = vmatprep.subr.mxu0 %v179
    %569 = vmatpush1.msra.mxu0 %v178
    %570 = vmatprep.subr.mxu0 %v183
    %571 = vmatpush1.msra.mxu0 %v182
    %572 = vmatprep.subr.mxu0 %v187
    %573 = vmatpush1.msra.mxu0 %v186
    %574 = vmatprep.subr.mxu0 %v191
    %575 = vmatpush1.msra.mxu0 %v190
    %576 = vmatprep.subr.mxu0 %v195
    %577 = vmatpush1.msra.mxu0 %v194
    %578 = vmatprep.subr.mxu0 %v199
    %579 = vmatpush1.msra.mxu0 %v198
    %580 = vmatprep.subr.mxu0 %v203
    %581 = vmatpush1.msra.mxu0 %v202
    %582 = vmatprep.mubr.f32.mxu0 %v370
    %583 = vmatmul.mubr.f32.gmra.mrb[0].mxu0 %v362
    %v584 = vpop.f32.mrb[0].mxu0
    %v585 = vadd.f32 %v345, %v584
    %v586 = vpop.f32.mrb[0].mxu0
    %v587 = vadd.f32 %v349, %v586
    %588 = vdwg.mxu0
    %589 = vmatprep.subr.mxu0 %v207
    %590 = vmatpush1.msra.mxu0 %v206
    %591 = vmatprep.subr.mxu0 %v211
    %592 = vmatpush1.msra.mxu0 %v210
    %593 = vmatprep.subr.mxu0 %v215
    %594 = vmatpush1.msra.mxu0 %v214
    %595 = vmatprep.subr.mxu0 %v219
    %596 = vmatpush1.msra.mxu0 %v218
    %597 = vmatprep.subr.mxu0 %v223
    %598 = vmatpush1.msra.mxu0 %v222
    %599 = vmatprep.subr.mxu0 %v227
    %600 = vmatpush1.msra.mxu0 %v226
    %601 = vmatprep.subr.mxu0 %v231
    %602 = vmatpush1.msra.mxu0 %v230
    %603 = vmatprep.subr.mxu0 %v235
    %604 = vmatpush1.msra.mxu0 %v234
    %605 = vmatprep.subr.mxu0 %v239
    %606 = vmatpush1.msra.mxu0 %v238
    %607 = vmatprep.subr.mxu0 %v243
    %608 = vmatpush1.msra.mxu0 %v242
    %609 = vmatprep.subr.mxu0 %v247
    %610 = vmatpush1.msra.mxu0 %v246
    %611 = vmatprep.subr.mxu0 %v251
    %612 = vmatpush1.msra.mxu0 %v250
    %613 = vmatprep.subr.mxu0 %v255
    %614 = vmatpush1.msra.mxu0 %v254
    %615 = vmatprep.subr.mxu0 %v259
    %616 = vmatpush1.msra.mxu0 %v258
    %617 = vmatprep.subr.mxu0 %v263
    %618 = vmatpush1.msra.mxu0 %v262
    %619 = vmatprep.subr.mxu0 %v267
    %620 = vmatpush1.msra.mxu0 %v266
    %621 = vmatprep.subr.mxu0 %v271
    %622 = vmatpush1.msra.mxu0 %v270
    %623 = vmatprep.subr.mxu0 %v275
    %624 = vmatpush1.msra.mxu0 %v274
    %625 = vmatprep.subr.mxu0 %v279
    %626 = vmatpush1.msra.mxu0 %v278
    %627 = vmatprep.subr.mxu0 %v283
    %628 = vmatpush1.msra.mxu0 %v282
    %629 = vmatprep.subr.mxu0 %v287
    %630 = vmatpush1.msra.mxu0 %v286
    %631 = vmatprep.subr.mxu0 %v291
    %632 = vmatpush1.msra.mxu0 %v290
    %633 = vmatprep.subr.mxu0 %v295
    %634 = vmatpush1.msra.mxu0 %v294
    %635 = vmatprep.subr.mxu0 %v299
    %636 = vmatpush1.msra.mxu0 %v298
    %637 = vmatprep.subr.mxu0 %v303
    %638 = vmatpush1.msra.mxu0 %v302
    %639 = vmatprep.subr.mxu0 %v307
    %640 = vmatpush1.msra.mxu0 %v306
    %641 = vmatprep.subr.mxu0 %v311
    %642 = vmatpush1.msra.mxu0 %v310
    %643 = vmatprep.subr.mxu0 %v315
    %644 = vmatpush1.msra.mxu0 %v314
    %645 = vmatprep.subr.mxu0 %v319
    %646 = vmatpush1.msra.mxu0 %v318
    %647 = vmatprep.subr.mxu0 %v323
    %648 = vmatpush1.msra.mxu0 %v322
    %649 = vmatprep.subr.mxu0 %v327
    %650 = vmatpush1.msra.mxu0 %v326
    %651 = vmatprep.subr.mxu0 %v331
    %652 = vmatpush1.msra.mxu0 %v330
    %653 = vmatprep.mubr.f32.mxu0 %v371
    %654 = vmatmul.mubr.f32.gmra.mrb[0].mxu0 %v369
    %v655 = vpop.f32.mrb[0].mxu0
    %v656 = vadd.f32 %v585, %v655
    %v657 = vpop.f32.mrb[0].mxu0
    %v658 = vadd.f32 %v587, %v657
    %659 = vdwg.mxu0
    %v660 = vmax.f32 %v514, 0.0
    %v661 = vmax.f32 %v516, 0.0
    %v662 = vmax.f32 %v656, 0.0
    %v663 = vmax.f32 %v658, 0.0
    %v664 = vld [vmem:[#allocation5] sm:$0xff]
    %v666 = vcombine.high %v664, %v664
    %v668 = vunpack.c.l.s4 1983009808
    %v669 = vunpack.c.0.s8 %v668
    %v670 = vlaneseq
    %v671 = vshrl.u32 %v670, 7
    %v672 = vsub.s32 %v669, %v671
    %v673 = vrot.slane %v664, %v672
    %v675 = vunpack.c.l.s4 1983009808
    %v676 = vunpack.c.0.s8 %v675
    %v677 = vlaneseq
    %v678 = vshrl.u32 %v677, 7
    %v679 = vsub.s32 %v676, %v678
    %v680 = vrot.slane %v666, %v679
    %v681 = vcombine.high %v673, %v673
    %v682 = vcombine.high %v680, %v680
    %v687 = vadd.f32 %v660, %v673
    %v688 = vadd.f32 %v661, %v681
    %v689 = vadd.f32 %v662, %v680
    %v690 = vadd.f32 %v663, %v682
    %v691 = vld [vmem:[#allocation8] sm:$0xff]
    %v692 = vld [vmem:[#allocation8 + $0x8] sm:$0xff]
    %v693 = vld [vmem:[#allocation8 + $0x10] sm:$0xff]
    %v694 = vld [vmem:[#allocation8 + $0x18] sm:$0xff]
    %v695 = vld [vmem:[#allocation8 + $0x20] sm:$0xff]
    %v696 = vld [vmem:[#allocation8 + $0x28] sm:$0xff]
    %v697 = vld [vmem:[#allocation8 + $0x30] sm:$0xff]
    %v698 = vld [vmem:[#allocation8 + $0x38] sm:$0xff]
    %v699 = vld [vmem:[#allocation8 + $0x40] sm:$0xff]
    %v700 = vld [vmem:[#allocation8 + $0x48] sm:$0xff]
    %v701 = vld [vmem:[#allocation8 + $0x50] sm:$0xff]
    %v702 = vld [vmem:[#allocation8 + $0x58] sm:$0xff]
    %v703 = vld [vmem:[#allocation8 + $0x60] sm:$0xff]
    %v704 = vld [vmem:[#allocation8 + $0x68] sm:$0xff]
    %v705 = vld [vmem:[#allocation8 + $0x70] sm:$0xff]
    %v706 = vld [vmem:[#allocation8 + $0x78] sm:$0xff]
    %v707 = vld [vmem:[#allocation8 + $0x80] sm:$0xff]
    %v708 = vld [vmem:[#allocation8 + $0x88] sm:$0xff]
    %v709 = vld [vmem:[#allocation8 + $0x90] sm:$0xff]
    %v710 = vld [vmem:[#allocation8 + $0x98] sm:$0xff]
    %v711 = vld [vmem:[#allocation8 + $0xa0] sm:$0xff]
    %v712 = vld [vmem:[#allocation8 + $0xa8] sm:$0xff]
    %v713 = vld [vmem:[#allocation8 + $0xb0] sm:$0xff]
    %v714 = vld [vmem:[#allocation8 + $0xb8] sm:$0xff]
    %v715 = vld [vmem:[#allocation8 + $0xc0] sm:$0xff]
    %v716 = vld [vmem:[#allocation8 + $0xc8] sm:$0xff]
    %v717 = vld [vmem:[#allocation8 + $0xd0] sm:$0xff]
    %v718 = vld [vmem:[#allocation8 + $0xd8] sm:$0xff]
    %v719 = vld [vmem:[#allocation8 + $0xe0] sm:$0xff]
    %v720 = vld [vmem:[#allocation8 + $0xe8] sm:$0xff]
    %v721 = vld [vmem:[#allocation8 + $0xf0] sm:$0xff]
    %v722 = vld [vmem:[#allocation8 + $0xf8] sm:$0xff]
    %v723 = vld [vmem:[#allocation8 + $0x100] sm:$0xff]
    %v724 = vld [vmem:[#allocation8 + $0x108] sm:$0xff]
    %v725 = vld [vmem:[#allocation8 + $0x110] sm:$0xff]
    %v726 = vld [vmem:[#allocation8 + $0x118] sm:$0xff]
    %v727 = vld [vmem:[#allocation8 + $0x120] sm:$0xff]
    %v728 = vld [vmem:[#allocation8 + $0x128] sm:$0xff]
    %v729 = vld [vmem:[#allocation8 + $0x130] sm:$0xff]
    %v730 = vld [vmem:[#allocation8 + $0x138] sm:$0xff]
    %v731 = vld [vmem:[#allocation8 + $0x140] sm:$0xff]
    %v732 = vld [vmem:[#allocation8 + $0x148] sm:$0xff]
    %v733 = vld [vmem:[#allocation8 + $0x150] sm:$0xff]
    %v734 = vld [vmem:[#allocation8 + $0x158] sm:$0xff]
    %v735 = vld [vmem:[#allocation8 + $0x160] sm:$0xff]
    %v736 = vld [vmem:[#allocation8 + $0x168] sm:$0xff]
    %v737 = vld [vmem:[#allocation8 + $0x170] sm:$0xff]
    %v738 = vld [vmem:[#allocation8 + $0x178] sm:$0xff]
    %v739 = vld [vmem:[#allocation8 + $0x180] sm:$0xff]
    %v740 = vld [vmem:[#allocation8 + $0x188] sm:$0xff]
    %v741 = vld [vmem:[#allocation8 + $0x190] sm:$0xff]
    %v742 = vld [vmem:[#allocation8 + $0x198] sm:$0xff]
    %v743 = vld [vmem:[#allocation8 + $0x1a0] sm:$0xff]
    %v744 = vld [vmem:[#allocation8 + $0x1a8] sm:$0xff]
    %v745 = vld [vmem:[#allocation8 + $0x1b0] sm:$0xff]
    %v746 = vld [vmem:[#allocation8 + $0x1b8] sm:$0xff]
    %v747 = vld [vmem:[#allocation8 + $0x1c0] sm:$0xff]
    %v748 = vld [vmem:[#allocation8 + $0x1c8] sm:$0xff]
    %v749 = vld [vmem:[#allocation8 + $0x1d0] sm:$0xff]
    %v750 = vld [vmem:[#allocation8 + $0x1d8] sm:$0xff]
    %v751 = vld [vmem:[#allocation8 + $0x1e0] sm:$0xff]
    %v752 = vld [vmem:[#allocation8 + $0x1e8] sm:$0xff]
    %v753 = vld [vmem:[#allocation8 + $0x1f0] sm:$0xff]
    %v754 = vld [vmem:[#allocation8 + $0x1f8] sm:$0xff]
    %v755 = vld [vmem:[#allocation8 + $0x200] sm:$0xff]
    %v756 = vld [vmem:[#allocation8 + $0x208] sm:$0xff]
    %v757 = vld [vmem:[#allocation8 + $0x210] sm:$0xff]
    %v758 = vld [vmem:[#allocation8 + $0x218] sm:$0xff]
    %v759 = vld [vmem:[#allocation8 + $0x220] sm:$0xff]
    %v760 = vld [vmem:[#allocation8 + $0x228] sm:$0xff]
    %v761 = vld [vmem:[#allocation8 + $0x230] sm:$0xff]
    %v762 = vld [vmem:[#allocation8 + $0x238] sm:$0xff]
    %v763 = vld [vmem:[#allocation8 + $0x240] sm:$0xff]
    %v764 = vld [vmem:[#allocation8 + $0x248] sm:$0xff]
    %v765 = vld [vmem:[#allocation8 + $0x250] sm:$0xff]
    %v766 = vld [vmem:[#allocation8 + $0x258] sm:$0xff]
    %v767 = vld [vmem:[#allocation8 + $0x260] sm:$0xff]
    %v768 = vld [vmem:[#allocation8 + $0x268] sm:$0xff]
    %v769 = vld [vmem:[#allocation8 + $0x270] sm:$0xff]
    %v770 = vld [vmem:[#allocation8 + $0x278] sm:$0xff]
    %v771 = vld [vmem:[#allocation8 + $0x280] sm:$0xff]
    %v772 = vld [vmem:[#allocation8 + $0x288] sm:$0xff]
    %v773 = vld [vmem:[#allocation8 + $0x290] sm:$0xff]
    %v774 = vld [vmem:[#allocation8 + $0x298] sm:$0xff]
    %v775 = vld [vmem:[#allocation8 + $0x2a0] sm:$0xff]
    %v776 = vld [vmem:[#allocation8 + $0x2a8] sm:$0xff]
    %v777 = vld [vmem:[#allocation8 + $0x2b0] sm:$0xff]
    %v778 = vld [vmem:[#allocation8 + $0x2b8] sm:$0xff]
    %v779 = vld [vmem:[#allocation8 + $0x2c0] sm:$0xff]
    %v780 = vld [vmem:[#allocation8 + $0x2c8] sm:$0xff]
    %v781 = vld [vmem:[#allocation8 + $0x2d0] sm:$0xff]
    %v782 = vld [vmem:[#allocation8 + $0x2d8] sm:$0xff]
    %v783 = vld [vmem:[#allocation8 + $0x2e0] sm:$0xff]
    %v784 = vld [vmem:[#allocation8 + $0x2e8] sm:$0xff]
    %v785 = vld [vmem:[#allocation8 + $0x2f0] sm:$0xff]
    %v786 = vld [vmem:[#allocation8 + $0x2f8] sm:$0xff]
    %v787 = vld [vmem:[#allocation8 + $0x300] sm:$0xff]
    %v788 = vld [vmem:[#allocation8 + $0x308] sm:$0xff]
    %v789 = vld [vmem:[#allocation8 + $0x310] sm:$0xff]
    %v790 = vld [vmem:[#allocation8 + $0x318] sm:$0xff]
    %v791 = vld [vmem:[#allocation8 + $0x320] sm:$0xff]
    %v792 = vld [vmem:[#allocation8 + $0x328] sm:$0xff]
    %v793 = vld [vmem:[#allocation8 + $0x330] sm:$0xff]
    %v794 = vld [vmem:[#allocation8 + $0x338] sm:$0xff]
    %v795 = vld [vmem:[#allocation8 + $0x340] sm:$0xff]
    %v796 = vld [vmem:[#allocation8 + $0x348] sm:$0xff]
    %v797 = vld [vmem:[#allocation8 + $0x350] sm:$0xff]
    %v798 = vld [vmem:[#allocation8 + $0x358] sm:$0xff]
    %v799 = vld [vmem:[#allocation8 + $0x360] sm:$0xff]
    %v800 = vld [vmem:[#allocation8 + $0x368] sm:$0xff]
    %v801 = vld [vmem:[#allocation8 + $0x370] sm:$0xff]
    %v802 = vld [vmem:[#allocation8 + $0x378] sm:$0xff]
    %v803 = vld [vmem:[#allocation8 + $0x380] sm:$0xff]
    %v804 = vld [vmem:[#allocation8 + $0x388] sm:$0xff]
    %v805 = vld [vmem:[#allocation8 + $0x390] sm:$0xff]
    %v806 = vld [vmem:[#allocation8 + $0x398] sm:$0xff]
    %v807 = vld [vmem:[#allocation8 + $0x3a0] sm:$0xff]
    %v808 = vld [vmem:[#allocation8 + $0x3a8] sm:$0xff]
    %v809 = vld [vmem:[#allocation8 + $0x3b0] sm:$0xff]
    %v810 = vld [vmem:[#allocation8 + $0x3b8] sm:$0xff]
    %v811 = vld [vmem:[#allocation8 + $0x3c0] sm:$0xff]
    %v812 = vld [vmem:[#allocation8 + $0x3c8] sm:$0xff]
    %v813 = vld [vmem:[#allocation8 + $0x3d0] sm:$0xff]
    %v814 = vld [vmem:[#allocation8 + $0x3d8] sm:$0xff]
    %v815 = vld [vmem:[#allocation8 + $0x3e0] sm:$0xff]
    %v816 = vld [vmem:[#allocation8 + $0x3e8] sm:$0xff]
    %v817 = vld [vmem:[#allocation8 + $0x3f0] sm:$0xff]
    %v818 = vld [vmem:[#allocation8 + $0x3f8] sm:$0xff]
    %v819 = vld [vmem:[#allocation8 + $0x400] sm:$0xff]
    %v820 = vld [vmem:[#allocation8 + $0x408] sm:$0xff]
    %v821 = vld [vmem:[#allocation8 + $0x410] sm:$0xff]
    %v822 = vld [vmem:[#allocation8 + $0x418] sm:$0xff]
    %v823 = vld [vmem:[#allocation8 + $0x420] sm:$0xff]
    %v824 = vld [vmem:[#allocation8 + $0x428] sm:$0xff]
    %v825 = vld [vmem:[#allocation8 + $0x430] sm:$0xff]
    %v826 = vld [vmem:[#allocation8 + $0x438] sm:$0xff]
    %v827 = vld [vmem:[#allocation8 + $0x440] sm:$0xff]
    %v828 = vld [vmem:[#allocation8 + $0x448] sm:$0xff]
    %v829 = vld [vmem:[#allocation8 + $0x450] sm:$0xff]
    %v830 = vld [vmem:[#allocation8 + $0x458] sm:$0xff]
    %v831 = vld [vmem:[#allocation8 + $0x460] sm:$0xff]
    %v832 = vld [vmem:[#allocation8 + $0x468] sm:$0xff]
    %v833 = vld [vmem:[#allocation8 + $0x470] sm:$0xff]
    %v834 = vld [vmem:[#allocation8 + $0x478] sm:$0xff]
    %v835 = vld [vmem:[#allocation8 + $0x480] sm:$0xff]
    %v836 = vld [vmem:[#allocation8 + $0x488] sm:$0xff]
    %v837 = vld [vmem:[#allocation8 + $0x490] sm:$0xff]
    %v838 = vld [vmem:[#allocation8 + $0x498] sm:$0xff]
    %v839 = vld [vmem:[#allocation8 + $0x4a0] sm:$0xff]
    %v840 = vld [vmem:[#allocation8 + $0x4a8] sm:$0xff]
    %v841 = vld [vmem:[#allocation8 + $0x4b0] sm:$0xff]
    %v842 = vld [vmem:[#allocation8 + $0x4b8] sm:$0xff]
    %v843 = vld [vmem:[#allocation8 + $0x4c0] sm:$0xff]
    %v844 = vld [vmem:[#allocation8 + $0x4c8] sm:$0xff]
    %v845 = vld [vmem:[#allocation8 + $0x4d0] sm:$0xff]
    %v846 = vld [vmem:[#allocation8 + $0x4d8] sm:$0xff]
    %v847 = vld [vmem:[#allocation8 + $0x4e0] sm:$0xff]
    %v848 = vld [vmem:[#allocation8 + $0x4e8] sm:$0xff]
    %v849 = vld [vmem:[#allocation8 + $0x4f0] sm:$0xff]
    %v850 = vld [vmem:[#allocation8 + $0x4f8] sm:$0xff]
    %v851 = vld [vmem:[#allocation8 + $0x500] sm:$0xff]
    %v852 = vld [vmem:[#allocation8 + $0x508] sm:$0xff]
    %v853 = vld [vmem:[#allocation8 + $0x510] sm:$0xff]
    %v854 = vld [vmem:[#allocation8 + $0x518] sm:$0xff]
    %v855 = vld [vmem:[#allocation8 + $0x520] sm:$0xff]
    %v856 = vld [vmem:[#allocation8 + $0x528] sm:$0xff]
    %v857 = vld [vmem:[#allocation8 + $0x530] sm:$0xff]
    %v858 = vld [vmem:[#allocation8 + $0x538] sm:$0xff]
    %v859 = vld [vmem:[#allocation8 + $0x540] sm:$0xff]
    %v860 = vld [vmem:[#allocation8 + $0x548] sm:$0xff]
    %v861 = vld [vmem:[#allocation8 + $0x550] sm:$0xff]
    %v862 = vld [vmem:[#allocation8 + $0x558] sm:$0xff]
    %v863 = vld [vmem:[#allocation8 + $0x560] sm:$0xff]
    %v864 = vld [vmem:[#allocation8 + $0x568] sm:$0xff]
    %v865 = vld [vmem:[#allocation8 + $0x570] sm:$0xff]
    %v866 = vld [vmem:[#allocation8 + $0x578] sm:$0xff]
    %v867 = vld [vmem:[#allocation8 + $0x580] sm:$0xff]
    %v868 = vld [vmem:[#allocation8 + $0x588] sm:$0xff]
    %v869 = vld [vmem:[#allocation8 + $0x590] sm:$0xff]
    %v870 = vld [vmem:[#allocation8 + $0x598] sm:$0xff]
    %v871 = vld [vmem:[#allocation8 + $0x5a0] sm:$0xff]
    %v872 = vld [vmem:[#allocation8 + $0x5a8] sm:$0xff]
    %v873 = vld [vmem:[#allocation8 + $0x5b0] sm:$0xff]
    %v874 = vld [vmem:[#allocation8 + $0x5b8] sm:$0xff]
    %v875 = vld [vmem:[#allocation8 + $0x5c0] sm:$0xff]
    %v876 = vld [vmem:[#allocation8 + $0x5c8] sm:$0xff]
    %v877 = vld [vmem:[#allocation8 + $0x5d0] sm:$0xff]
    %v878 = vld [vmem:[#allocation8 + $0x5d8] sm:$0xff]
    %v879 = vld [vmem:[#allocation8 + $0x5e0] sm:$0xff]
    %v880 = vld [vmem:[#allocation8 + $0x5e8] sm:$0xff]
    %v881 = vld [vmem:[#allocation8 + $0x5f0] sm:$0xff]
    %v882 = vld [vmem:[#allocation8 + $0x5f8] sm:$0xff]
    %v883 = vld [vmem:[#allocation8 + $0x600] sm:$0xff]
    %v884 = vld [vmem:[#allocation8 + $0x608] sm:$0xff]
    %v885 = vld [vmem:[#allocation8 + $0x610] sm:$0xff]
    %v886 = vld [vmem:[#allocation8 + $0x618] sm:$0xff]
    %v887 = vld [vmem:[#allocation8 + $0x620] sm:$0xff]
    %v888 = vld [vmem:[#allocation8 + $0x628] sm:$0xff]
    %v889 = vld [vmem:[#allocation8 + $0x630] sm:$0xff]
    %v890 = vld [vmem:[#allocation8 + $0x638] sm:$0xff]
    %v891 = vld [vmem:[#allocation8 + $0x640] sm:$0xff]
    %v892 = vld [vmem:[#allocation8 + $0x648] sm:$0xff]
    %v893 = vld [vmem:[#allocation8 + $0x650] sm:$0xff]
    %v894 = vld [vmem:[#allocation8 + $0x658] sm:$0xff]
    %v895 = vld [vmem:[#allocation8 + $0x660] sm:$0xff]
    %v896 = vld [vmem:[#allocation8 + $0x668] sm:$0xff]
    %v897 = vld [vmem:[#allocation8 + $0x670] sm:$0xff]
    %v898 = vld [vmem:[#allocation8 + $0x678] sm:$0xff]
    %v899 = vld [vmem:[#allocation8 + $0x680] sm:$0xff]
    %v900 = vld [vmem:[#allocation8 + $0x688] sm:$0xff]
    %v901 = vld [vmem:[#allocation8 + $0x690] sm:$0xff]
    %v902 = vld [vmem:[#allocation8 + $0x698] sm:$0xff]
    %v903 = vld [vmem:[#allocation8 + $0x6a0] sm:$0xff]
    %v904 = vld [vmem:[#allocation8 + $0x6a8] sm:$0xff]
    %v905 = vld [vmem:[#allocation8 + $0x6b0] sm:$0xff]
    %v906 = vld [vmem:[#allocation8 + $0x6b8] sm:$0xff]
    %v907 = vld [vmem:[#allocation8 + $0x6c0] sm:$0xff]
    %v908 = vld [vmem:[#allocation8 + $0x6c8] sm:$0xff]
    %v909 = vld [vmem:[#allocation8 + $0x6d0] sm:$0xff]
    %v910 = vld [vmem:[#allocation8 + $0x6d8] sm:$0xff]
    %v911 = vld [vmem:[#allocation8 + $0x6e0] sm:$0xff]
    %v912 = vld [vmem:[#allocation8 + $0x6e8] sm:$0xff]
    %v913 = vld [vmem:[#allocation8 + $0x6f0] sm:$0xff]
    %v914 = vld [vmem:[#allocation8 + $0x6f8] sm:$0xff]
    %v915 = vld [vmem:[#allocation8 + $0x700] sm:$0xff]
    %v916 = vld [vmem:[#allocation8 + $0x708] sm:$0xff]
    %v917 = vld [vmem:[#allocation8 + $0x710] sm:$0xff]
    %v918 = vld [vmem:[#allocation8 + $0x718] sm:$0xff]
    %v919 = vld [vmem:[#allocation8 + $0x720] sm:$0xff]
    %v920 = vld [vmem:[#allocation8 + $0x728] sm:$0xff]
    %v921 = vld [vmem:[#allocation8 + $0x730] sm:$0xff]
    %v922 = vld [vmem:[#allocation8 + $0x738] sm:$0xff]
    %v923 = vld [vmem:[#allocation8 + $0x740] sm:$0xff]
    %v924 = vld [vmem:[#allocation8 + $0x748] sm:$0xff]
    %v925 = vld [vmem:[#allocation8 + $0x750] sm:$0xff]
    %v926 = vld [vmem:[#allocation8 + $0x758] sm:$0xff]
    %v927 = vld [vmem:[#allocation8 + $0x760] sm:$0xff]
    %v928 = vld [vmem:[#allocation8 + $0x768] sm:$0xff]
    %v929 = vld [vmem:[#allocation8 + $0x770] sm:$0xff]
    %v930 = vld [vmem:[#allocation8 + $0x778] sm:$0xff]
    %v931 = vld [vmem:[#allocation8 + $0x780] sm:$0xff]
    %v932 = vld [vmem:[#allocation8 + $0x788] sm:$0xff]
    %v933 = vld [vmem:[#allocation8 + $0x790] sm:$0xff]
    %v934 = vld [vmem:[#allocation8 + $0x798] sm:$0xff]
    %v935 = vld [vmem:[#allocation8 + $0x7a0] sm:$0xff]
    %v936 = vld [vmem:[#allocation8 + $0x7a8] sm:$0xff]
    %v937 = vld [vmem:[#allocation8 + $0x7b0] sm:$0xff]
    %v938 = vld [vmem:[#allocation8 + $0x7b8] sm:$0xff]
    %v939 = vld [vmem:[#allocation8 + $0x7c0] sm:$0xff]
    %v940 = vld [vmem:[#allocation8 + $0x7c8] sm:$0xff]
    %v941 = vld [vmem:[#allocation8 + $0x7d0] sm:$0xff]
    %v942 = vld [vmem:[#allocation8 + $0x7d8] sm:$0xff]
    %v943 = vld [vmem:[#allocation8 + $0x7e0] sm:$0xff]
    %v944 = vld [vmem:[#allocation8 + $0x7e8] sm:$0xff]
    %v945 = vld [vmem:[#allocation8 + $0x7f0] sm:$0xff]
    %v946 = vld [vmem:[#allocation8 + $0x7f8] sm:$0xff]
    %v947 = vld [vmem:[%s5] sm:$0xf]
    %v949 = vlaneseq
    %v950 = vshrl.u32 %v949, 7
    %v951 = vsub.s32 0, %v950
    %v952 = vrot.slane %v947, %v951
    %v953 = vlaneseq
    %v954 = vshrl.u32 %v953, 7
    %v955 = vsub.s32 1, %v954
    %v956 = vrot.slane %v947, %v955
    %v957 = vlaneseq
    %v958 = vshrl.u32 %v957, 7
    %v959 = vsub.s32 2, %v958
    %v960 = vrot.slane %v947, %v959
    %v961 = vlaneseq
    %v962 = vshrl.u32 %v961, 7
    %v963 = vsub.s32 3, %v962
    %v964 = vrot.slane %v947, %v963
    %969 = vmatprep.subr.mxu0 %v692
    %970 = vmatpush1.msra.mxu0 %v691
    %971 = vmatprep.subr.mxu0 %v696
    %972 = vmatpush1.msra.mxu0 %v695
    %973 = vmatprep.subr.mxu0 %v700
    %974 = vmatpush1.msra.mxu0 %v699
    %975 = vmatprep.subr.mxu0 %v704
    %976 = vmatpush1.msra.mxu0 %v703
    %977 = vmatprep.subr.mxu0 %v708
    %978 = vmatpush1.msra.mxu0 %v707
    %979 = vmatprep.subr.mxu0 %v712
    %980 = vmatpush1.msra.mxu0 %v711
    %981 = vmatprep.subr.mxu0 %v716
    %982 = vmatpush1.msra.mxu0 %v715
    %983 = vmatprep.subr.mxu0 %v720
    %984 = vmatpush1.msra.mxu0 %v719
    %985 = vmatprep.subr.mxu0 %v724
    %986 = vmatpush1.msra.mxu0 %v723
    %987 = vmatprep.subr.mxu0 %v728
    %988 = vmatpush1.msra.mxu0 %v727
    %989 = vmatprep.subr.mxu0 %v732
    %990 = vmatpush1.msra.mxu0 %v731
    %991 = vmatprep.subr.mxu0 %v736
    %992 = vmatpush1.msra.mxu0 %v735
    %993 = vmatprep.subr.mxu0 %v740
    %994 = vmatpush1.msra.mxu0 %v739
    %995 = vmatprep.subr.mxu0 %v744
    %996 = vmatpush1.msra.mxu0 %v743
    %997 = vmatprep.subr.mxu0 %v748
    %998 = vmatpush1.msra.mxu0 %v747
    %999 = vmatprep.subr.mxu0 %v752
    %1000 = vmatpush1.msra.mxu0 %v751
    %1001 = vmatprep.subr.mxu0 %v756
    %1002 = vmatpush1.msra.mxu0 %v755
    %1003 = vmatprep.subr.mxu0 %v760
    %1004 = vmatpush1.msra.mxu0 %v759
    %1005 = vmatprep.subr.mxu0 %v764
    %1006 = vmatpush1.msra.mxu0 %v763
    %1007 = vmatprep.subr.mxu0 %v768
    %1008 = vmatpush1.msra.mxu0 %v767
    %1009 = vmatprep.subr.mxu0 %v772
    %1010 = vmatpush1.msra.mxu0 %v771
    %1011 = vmatprep.subr.mxu0 %v776
    %1012 = vmatpush1.msra.mxu0 %v775
    %1013 = vmatprep.subr.mxu0 %v780
    %1014 = vmatpush1.msra.mxu0 %v779
    %1015 = vmatprep.subr.mxu0 %v784
    %1016 = vmatpush1.msra.mxu0 %v783
    %1017 = vmatprep.subr.mxu0 %v788
    %1018 = vmatpush1.msra.mxu0 %v787
    %1019 = vmatprep.subr.mxu0 %v792
    %1020 = vmatpush1.msra.mxu0 %v791
    %1021 = vmatprep.subr.mxu0 %v796
    %1022 = vmatpush1.msra.mxu0 %v795
    %1023 = vmatprep.subr.mxu0 %v800
    %1024 = vmatpush1.msra.mxu0 %v799
    %1025 = vmatprep.subr.mxu0 %v804
    %1026 = vmatpush1.msra.mxu0 %v803
    %1027 = vmatprep.subr.mxu0 %v808
    %1028 = vmatpush1.msra.mxu0 %v807
    %1029 = vmatprep.subr.mxu0 %v812
    %1030 = vmatpush1.msra.mxu0 %v811
    %1031 = vmatprep.subr.mxu0 %v816
    %1032 = vmatpush1.msra.mxu0 %v815
    %1033 = vmatprep.mubr.f32.mxu0 %v688
    %1034 = vmatmul.mubr.f32.gmra.mrb[0].mxu0 %v687
    %v1035 = vpop.f32.mrb[0].mxu0
    %v1036 = vadd.f32 %v952, %v1035
    %v1037 = vpop.f32.mrb[0].mxu0
    %v1038 = vadd.f32 %v956, %v1037
    %1039 = vdwg.mxu0
    %1040 = vmatprep.subr.mxu0 %v820
    %1041 = vmatpush1.msra.mxu0 %v819
    %1042 = vmatprep.subr.mxu0 %v824
    %1043 = vmatpush1.msra.mxu0 %v823
    %1044 = vmatprep.subr.mxu0 %v828
    %1045 = vmatpush1.msra.mxu0 %v827
    %1046 = vmatprep.subr.mxu0 %v832
    %1047 = vmatpush1.msra.mxu0 %v831
    %1048 = vmatprep.subr.mxu0 %v836
    %1049 = vmatpush1.msra.mxu0 %v835
    %1050 = vmatprep.subr.mxu0 %v840
    %1051 = vmatpush1.msra.mxu0 %v839
    %1052 = vmatprep.subr.mxu0 %v844
    %1053 = vmatpush1.msra.mxu0 %v843
    %1054 = vmatprep.subr.mxu0 %v848
    %1055 = vmatpush1.msra.mxu0 %v847
    %1056 = vmatprep.subr.mxu0 %v852
    %1057 = vmatpush1.msra.mxu0 %v851
    %1058 = vmatprep.subr.mxu0 %v856
    %1059 = vmatpush1.msra.mxu0 %v855
    %1060 = vmatprep.subr.mxu0 %v860
    %1061 = vmatpush1.msra.mxu0 %v859
    %1062 = vmatprep.subr.mxu0 %v864
    %1063 = vmatpush1.msra.mxu0 %v863
    %1064 = vmatprep.subr.mxu0 %v868
    %1065 = vmatpush1.msra.mxu0 %v867
    %1066 = vmatprep.subr.mxu0 %v872
    %1067 = vmatpush1.msra.mxu0 %v871
    %1068 = vmatprep.subr.mxu0 %v876
    %1069 = vmatpush1.msra.mxu0 %v875
    %1070 = vmatprep.subr.mxu0 %v880
    %1071 = vmatpush1.msra.mxu0 %v879
    %1072 = vmatprep.subr.mxu0 %v884
    %1073 = vmatpush1.msra.mxu0 %v883
    %1074 = vmatprep.subr.mxu0 %v888
    %1075 = vmatpush1.msra.mxu0 %v887
    %1076 = vmatprep.subr.mxu0 %v892
    %1077 = vmatpush1.msra.mxu0 %v891
    %1078 = vmatprep.subr.mxu0 %v896
    %1079 = vmatpush1.msra.mxu0 %v895
    %1080 = vmatprep.subr.mxu0 %v900
    %1081 = vmatpush1.msra.mxu0 %v899
    %1082 = vmatprep.subr.mxu0 %v904
    %1083 = vmatpush1.msra.mxu0 %v903
    %1084 = vmatprep.subr.mxu0 %v908
    %1085 = vmatpush1.msra.mxu0 %v907
    %1086 = vmatprep.subr.mxu0 %v912
    %1087 = vmatpush1.msra.mxu0 %v911
    %1088 = vmatprep.subr.mxu0 %v916
    %1089 = vmatpush1.msra.mxu0 %v915
    %1090 = vmatprep.subr.mxu0 %v920
    %1091 = vmatpush1.msra.mxu0 %v919
    %1092 = vmatprep.subr.mxu0 %v924
    %1093 = vmatpush1.msra.mxu0 %v923
    %1094 = vmatprep.subr.mxu0 %v928
    %1095 = vmatpush1.msra.mxu0 %v927
    %1096 = vmatprep.subr.mxu0 %v932
    %1097 = vmatpush1.msra.mxu0 %v931
    %1098 = vmatprep.subr.mxu0 %v936
    %1099 = vmatpush1.msra.mxu0 %v935
    %1100 = vmatprep.subr.mxu0 %v940
    %1101 = vmatpush1.msra.mxu0 %v939
    %1102 = vmatprep.subr.mxu0 %v944
    %1103 = vmatpush1.msra.mxu0 %v943
    %1104 = vmatprep.mubr.f32.mxu0 %v690
    %1105 = vmatmul.mubr.f32.gmra.mrb[0].mxu0 %v689
    %v1106 = vpop.f32.mrb[0].mxu0
    %v1107 = vadd.f32 %v1036, %v1106
    %v1108 = vpop.f32.mrb[0].mxu0
    %v1109 = vadd.f32 %v1038, %v1108
    %1110 = vdwg.mxu0
    %1111 = vmatprep.subr.mxu0 %v694
    %1112 = vmatpush1.msra.mxu0 %v693
    %1113 = vmatprep.subr.mxu0 %v698
    %1114 = vmatpush1.msra.mxu0 %v697
    %1115 = vmatprep.subr.mxu0 %v702
    %1116 = vmatpush1.msra.mxu0 %v701
    %1117 = vmatprep.subr.mxu0 %v706
    %1118 = vmatpush1.msra.mxu0 %v705
    %1119 = vmatprep.subr.mxu0 %v710
    %1120 = vmatpush1.msra.mxu0 %v709
    %1121 = vmatprep.subr.mxu0 %v714
    %1122 = vmatpush1.msra.mxu0 %v713
    %1123 = vmatprep.subr.mxu0 %v718
    %1124 = vmatpush1.msra.mxu0 %v717
    %1125 = vmatprep.subr.mxu0 %v722
    %1126 = vmatpush1.msra.mxu0 %v721
    %1127 = vmatprep.subr.mxu0 %v726
    %1128 = vmatpush1.msra.mxu0 %v725
    %1129 = vmatprep.subr.mxu0 %v730
    %1130 = vmatpush1.msra.mxu0 %v729
    %1131 = vmatprep.subr.mxu0 %v734
    %1132 = vmatpush1.msra.mxu0 %v733
    %1133 = vmatprep.subr.mxu0 %v738
    %1134 = vmatpush1.msra.mxu0 %v737
    %1135 = vmatprep.subr.mxu0 %v742
    %1136 = vmatpush1.msra.mxu0 %v741
    %1137 = vmatprep.subr.mxu0 %v746
    %1138 = vmatpush1.msra.mxu0 %v745
    %1139 = vmatprep.subr.mxu0 %v750
    %1140 = vmatpush1.msra.mxu0 %v749
    %1141 = vmatprep.subr.mxu0 %v754
    %1142 = vmatpush1.msra.mxu0 %v753
    %1143 = vmatprep.subr.mxu0 %v758
    %1144 = vmatpush1.msra.mxu0 %v757
    %1145 = vmatprep.subr.mxu0 %v762
    %1146 = vmatpush1.msra.mxu0 %v761
    %1147 = vmatprep.subr.mxu0 %v766
    %1148 = vmatpush1.msra.mxu0 %v765
    %1149 = vmatprep.subr.mxu0 %v770
    %1150 = vmatpush1.msra.mxu0 %v769
    %1151 = vmatprep.subr.mxu0 %v774
    %1152 = vmatpush1.msra.mxu0 %v773
    %1153 = vmatprep.subr.mxu0 %v778
    %1154 = vmatpush1.msra.mxu0 %v777
    %1155 = vmatprep.subr.mxu0 %v782
    %1156 = vmatpush1.msra.mxu0 %v781
    %1157 = vmatprep.subr.mxu0 %v786
    %1158 = vmatpush1.msra.mxu0 %v785
    %1159 = vmatprep.subr.mxu0 %v790
    %1160 = vmatpush1.msra.mxu0 %v789
    %1161 = vmatprep.subr.mxu0 %v794
    %1162 = vmatpush1.msra.mxu0 %v793
    %1163 = vmatprep.subr.mxu0 %v798
    %1164 = vmatpush1.msra.mxu0 %v797
    %1165 = vmatprep.subr.mxu0 %v802
    %1166 = vmatpush1.msra.mxu0 %v801
    %1167 = vmatprep.subr.mxu0 %v806
    %1168 = vmatpush1.msra.mxu0 %v805
    %1169 = vmatprep.subr.mxu0 %v810
    %1170 = vmatpush1.msra.mxu0 %v809
    %1171 = vmatprep.subr.mxu0 %v814
    %1172 = vmatpush1.msra.mxu0 %v813
    %1173 = vmatprep.subr.mxu0 %v818
    %1174 = vmatpush1.msra.mxu0 %v817
    %1175 = vmatprep.mubr.f32.mxu0 %v688
    %1176 = vmatmul.mubr.f32.gmra.mrb[0].mxu0 %v687
    %v1177 = vpop.f32.mrb[0].mxu0
    %v1178 = vadd.f32 %v960, %v1177
    %v1179 = vpop.f32.mrb[0].mxu0
    %v1180 = vadd.f32 %v964, %v1179
    %1181 = vdwg.mxu0
    %1182 = vmatprep.subr.mxu0 %v822
    %1183 = vmatpush1.msra.mxu0 %v821
    %1184 = vmatprep.subr.mxu0 %v826
    %1185 = vmatpush1.msra.mxu0 %v825
    %1186 = vmatprep.subr.mxu0 %v830
    %1187 = vmatpush1.msra.mxu0 %v829
    %1188 = vmatprep.subr.mxu0 %v834
    %1189 = vmatpush1.msra.mxu0 %v833
    %1190 = vmatprep.subr.mxu0 %v838
    %1191 = vmatpush1.msra.mxu0 %v837
    %1192 = vmatprep.subr.mxu0 %v842
    %1193 = vmatpush1.msra.mxu0 %v841
    %1194 = vmatprep.subr.mxu0 %v846
    %1195 = vmatpush1.msra.mxu0 %v845
    %1196 = vmatprep.subr.mxu0 %v850
    %1197 = vmatpush1.msra.mxu0 %v849
    %1198 = vmatprep.subr.mxu0 %v854
    %1199 = vmatpush1.msra.mxu0 %v853
    %1200 = vmatprep.subr.mxu0 %v858
    %1201 = vmatpush1.msra.mxu0 %v857
    %1202 = vmatprep.subr.mxu0 %v862
    %1203 = vmatpush1.msra.mxu0 %v861
    %1204 = vmatprep.subr.mxu0 %v866
    %1205 = vmatpush1.msra.mxu0 %v865
    %1206 = vmatprep.subr.mxu0 %v870
    %1207 = vmatpush1.msra.mxu0 %v869
    %1208 = vmatprep.subr.mxu0 %v874
    %1209 = vmatpush1.msra.mxu0 %v873
    %1210 = vmatprep.subr.mxu0 %v878
    %1211 = vmatpush1.msra.mxu0 %v877
    %1212 = vmatprep.subr.mxu0 %v882
    %1213 = vmatpush1.msra.mxu0 %v881
    %1214 = vmatprep.subr.mxu0 %v886
    %1215 = vmatpush1.msra.mxu0 %v885
    %1216 = vmatprep.subr.mxu0 %v890
    %1217 = vmatpush1.msra.mxu0 %v889
    %1218 = vmatprep.subr.mxu0 %v894
    %1219 = vmatpush1.msra.mxu0 %v893
    %1220 = vmatprep.subr.mxu0 %v898
    %1221 = vmatpush1.msra.mxu0 %v897
    %1222 = vmatprep.subr.mxu0 %v902
    %1223 = vmatpush1.msra.mxu0 %v901
    %1224 = vmatprep.subr.mxu0 %v906
    %1225 = vmatpush1.msra.mxu0 %v905
    %1226 = vmatprep.subr.mxu0 %v910
    %1227 = vmatpush1.msra.mxu0 %v909
    %1228 = vmatprep.subr.mxu0 %v914
    %1229 = vmatpush1.msra.mxu0 %v913
    %1230 = vmatprep.subr.mxu0 %v918
    %1231 = vmatpush1.msra.mxu0 %v917
    %1232 = vmatprep.subr.mxu0 %v922
    %1233 = vmatpush1.msra.mxu0 %v921
    %1234 = vmatprep.subr.mxu0 %v926
    %1235 = vmatpush1.msra.mxu0 %v925
    %1236 = vmatprep.subr.mxu0 %v930
    %1237 = vmatpush1.msra.mxu0 %v929
    %1238 = vmatprep.subr.mxu0 %v934
    %1239 = vmatpush1.msra.mxu0 %v933
    %1240 = vmatprep.subr.mxu0 %v938
    %1241 = vmatpush1.msra.mxu0 %v937
    %1242 = vmatprep.subr.mxu0 %v942
    %1243 = vmatpush1.msra.mxu0 %v941
    %1244 = vmatprep.subr.mxu0 %v946
    %1245 = vmatpush1.msra.mxu0 %v945
    %1246 = vmatprep.mubr.f32.mxu0 %v690
    %1247 = vmatmul.mubr.f32.gmra.mrb[0].mxu0 %v689
    %v1248 = vpop.f32.mrb[0].mxu0
    %v1249 = vadd.f32 %v1178, %v1248
    %v1250 = vpop.f32.mrb[0].mxu0
    %v1251 = vadd.f32 %v1180, %v1250
    %1252 = vdwg.mxu0
    %v1253 = vmax.f32 %v1107, 0.0
    %v1254 = vmax.f32 %v1109, 0.0
    %v1255 = vmax.f32 %v1249, 0.0
    %v1256 = vmax.f32 %v1251, 0.0
    %v1261 = vcombine.low %v1253, %v1254
    %v1262 = vcombine.low %v1255, %v1256
    %v1264 = vunpack.c.l.s4 1983009808
    %v1265 = vunpack.c.0.s8 %v1264
    %v1266 = vlaneseq
    %v1267 = vshrl.u32 %v1266, 7
    %v1268 = vsub.s32 %v1265, %v1267
    %v1269 = vrot.slane %v1261, %v1268
    %v1271 = vunpack.c.l.s4 1983009808
    %v1272 = vunpack.c.0.s8 %v1271
    %v1273 = vlaneseq
    %v1274 = vshrl.u32 %v1273, 7
    %v1275 = vsub.s32 %v1272, %v1274
    %v1276 = vrot.slane %v1262, %v1275
    %v1277 = vcombine.low %v1269, %v1276
    %v1279 = vadd.f32 %v75, %v1277
    %1280 = vst [vmem:[#allocation10] sm:$0xff] %v1279
    // Predicated region
    $region42: #{tpu_custom_call.1} parent=1 // pred_check
      _
    $region43: #{tpu_custom_call.1} parent=1 // pred_check_branch
      %1282 = sbr.rel (0) target = $region45
    $region44: #{tpu_custom_call.1} parent=1 // pred_region
      %s1284 = ssub.s32 128, 128
      %1285 = vsyncadd [#allocation4], %s1284
      %s1287 = sshll.u32 [#allocation10], 4
      %s1288 = int_to_ptr.vmem [resolvable:$true] %s1287
      %1290 = dma.vmem_to_hbm [thread:$0]  %s1288, 128, %s6, [#allocation4]
    $region45: #{tpu_custom_call.1} parent=1 // pred_fallthru
      _
    // Predicated region
    $region46: #{tpu_custom_call.1} parent=1 // pred_check
      _
    $region47: #{tpu_custom_call.1} parent=1 // pred_check_branch
      %1292 = sbr.rel (0) target = $region49
    $region48: #{tpu_custom_call.1} parent=1 // pred_region
      %1293 = dma.done [#allocation4], 128
    $region49: #{tpu_custom_call.1} parent=1 // pred_fallthru
      _
    %1294 = vsyncpa [#allocation3], 1
    %1295 = vsyncpa [#allocation6], 1
    %1296 = vsyncpa [#allocation9], 1
    %1297 = vsyncpa [#allocation4], 1

</llo_original>
